<compile_context>
chip_gen: v7x
topology: tpu7x:2x2x1
jax: 0.10.0
libtpu: 0.0.40
codegen_flags: <defaults>
</compile_context>

<pallas_src>
import functools

import jax
import jax.numpy as jnp
import numpy as np
from jax.experimental import pallas as pl
from jax.experimental.pallas import tpu as pltpu

# ---- model hyperparameters (small, consistent with the module) ----
EMBED = 32
HEADS = 4
HEAD_DIM = EMBED // HEADS
FWD_EXP = 4
HIDDEN = FWD_EXP * EMBED
SEQ = 8
BATCH = 2
LN_EPS = 1e-5


def _layernorm(x, gamma, beta):
    # PyTorch nn.LayerNorm: biased variance, eps inside sqrt.
    mean = jnp.mean(x, axis=-1, keepdims=True)
    var = jnp.mean((x - mean) ** 2, axis=-1, keepdims=True)
    return (x - mean) * jax.lax.rsqrt(var + LN_EPS) * gamma + beta


def transformer_block_kernel(
    xqkv_ref,            # (N*S, 3E)   [q | k | v] concatenated along features
    wqkv_ref,            # (3E, 3E)    block-diag(Wq, Wk, Wv)
    wo_ref, bo_ref,      # (E, E), (1, E)
    w1_ref, b1_ref,      # (E, HID), (1, HID)
    w2_ref, b2_ref,      # (HID, E), (1, E)
    g1_ref, be1_ref,     # (1, E)
    g2_ref, be2_ref,     # (1, E)
    out_ref,             # (1, N*S*E)  lane-dense output slab
    *, batch, seq, heads, head_dim,
):
    embed = heads * head_dim
    tokens = batch * seq

    xqkv = xqkv_ref[...]                    # (tokens, 3E)
    q_in = xqkv[:, :embed]                  # residual branch = original queries

    # ---- fused Q/K/V projection: one MXU matmul ----
    qkv = jnp.dot(xqkv, wqkv_ref[...], preferred_element_type=jnp.float32)  # (tokens, 3E)
    q = qkv[:, 0 * embed:1 * embed]
    k = qkv[:, 1 * embed:2 * embed]
    v = qkv[:, 2 * embed:3 * embed]

    # ---- head split: (tokens, E) -> (batch*heads, seq, head_dim) ----
    def split_heads(x):
        blocks = []
        for n in range(batch):
            rows = x[n * seq:(n + 1) * seq, :]                      # (seq, E)
            for h in range(heads):
                blocks.append(rows[:, h * head_dim:(h + 1) * head_dim])  # (seq, hd)
        return jnp.stack(blocks, axis=0)                            # (batch*heads, seq, hd)

    qb, kb, vb = split_heads(q), split_heads(k), split_heads(v)

    # ---- batched scaled dot-product attention over all (batch, head) pairs ----
    scale = 1.0 / (float(head_dim) ** 0.5)
    energy = jnp.einsum("bqd,bkd->bqk", qb, kb,
                        preferred_element_type=jnp.float32) * scale  # (B*H, S, S)
    m = jnp.max(energy, axis=-1, keepdims=True)
    e = jnp.exp(energy - m)
    denom = jnp.sum(e, axis=-1, keepdims=True)
    attn = e * pl.reciprocal(denom, approx=True)                     # EUP reciprocal
    ctx = jnp.einsum("bqk,bkd->bqd", attn, vb,
                     preferred_element_type=jnp.float32)             # (B*H, S, hd)

    # ---- head merge: (batch*heads, seq, hd) -> (tokens, E) ----
    rows = []
    for n in range(batch):
        rows.append(jnp.concatenate(
            [ctx[n * heads + h] for h in range(heads)], axis=-1))    # (seq, E)
    ctx2 = jnp.concatenate(rows, axis=0)                             # (tokens, E)

    # ---- attention output projection (with bias) + residual + norm1 ----
    attn_out = jnp.dot(ctx2, wo_ref[...], preferred_element_type=jnp.float32) + bo_ref[...]
    x = _layernorm(attn_out + q_in, g1_ref[...], be1_ref[...])
    # TODO(synk): nn.Dropout after norm1 is training-only; inference => identity.

    # ---- feed-forward: Linear -> ReLU -> Linear, residual + norm2 ----
    h1 = jnp.dot(x, w1_ref[...], preferred_element_type=jnp.float32) + b1_ref[...]
    h1 = jnp.maximum(h1, 0.0)
    ff = jnp.dot(h1, w2_ref[...], preferred_element_type=jnp.float32) + b2_ref[...]
    y = _layernorm(ff + x, g2_ref[...], be2_ref[...])
    # TODO(synk): nn.Dropout after norm2 is training-only; inference => identity.

    # ---- lane-dense store: pack (tokens, E) -> (1, tokens*E) = (1, 512) lanes ----
    packed = jnp.concatenate([y[t:t + 1, :] for t in range(tokens)], axis=-1)
    out_ref[...] = packed.astype(out_ref.dtype)


def transformer_block(value, key, query, params):
    """value/key/query: (N, S, E) float32.  params: dict of weights (see init_params)."""
    N, S, E = query.shape
    NS = N * S

    # Flatten tokens and fuse q/k/v along features for a single projection matmul.
    xqkv = jnp.concatenate(
        [query.reshape(NS, E), key.reshape(NS, E), value.reshape(NS, E)], axis=-1)

    # Block-diagonal fused projection weight: [q|k|v] @ blockdiag(Wq, Wk, Wv) = [Q|K|V].
    wqkv = jnp.zeros((3 * E, 3 * E), jnp.float32)
    wqkv = wqkv.at[0 * E:1 * E, 0 * E:1 * E].set(params["wq"])
    wqkv = wqkv.at[1 * E:2 * E, 1 * E:2 * E].set(params["wk"])
    wqkv = wqkv.at[2 * E:3 * E, 2 * E:3 * E].set(params["wv"])

    full = lambda shape: pl.BlockSpec(shape, lambda n: (0,) * len(shape))

    in_specs = [
        full((NS, 3 * E)),                      # xqkv
        full((3 * E, 3 * E)),                   # fused Wqkv
        full((E, E)), full((1, E)),             # Wo, bo
        full((E, HIDDEN)), full((1, HIDDEN)),   # W1, b1
        full((HIDDEN, E)), full((1, E)),        # W2, b2
        full((1, E)), full((1, E)),             # gamma1, beta1
        full((1, E)), full((1, E)),             # gamma2, beta2
    ]

    kernel = functools.partial(
        transformer_block_kernel,
        batch=N, seq=S, heads=HEADS, head_dim=E // HEADS)

    out_flat = pl.pallas_call(
        kernel,
        out_shape=jax.ShapeDtypeStruct((1, NS * E), jnp.float32),
        grid_spec=pltpu.PrefetchScalarGridSpec(
            num_scalar_prefetch=0,
            grid=(1,),                          # batch folded: one step, all work in VMEM
            in_specs=in_specs,
            out_specs=full((1, NS * E)),        # lane-dense (512 lanes) output slab
        ),
        compiler_params=pltpu.CompilerParams(dimension_semantics=("arbitrary",)),
    )(
        xqkv, wqkv,
        params["wo"], params["bo"],
        params["w1"], params["b1"], params["w2"], params["b2"],
        params["g1"], params["be1"], params["g2"], params["be2"],
    )
    return out_flat.reshape(N, S, E)


def init_params(rng):
    """Deterministic parameter init. Linear weights stored pre-transposed as (in, out)."""
    ks = jax.random.split(rng, 8)
    scale = 0.05
    p = {
        "wv": scale * jax.random.normal(ks[0], (EMBED, EMBED), jnp.float32),
        "wk": scale * jax.random.normal(ks[1], (EMBED, EMBED), jnp.float32),
        "wq": scale * jax.random.normal(ks[2], (EMBED, EMBED), jnp.float32),
        "wo": scale * jax.random.normal(ks[3], (EMBED, EMBED), jnp.float32),
        "bo": scale * jax.random.normal(ks[4], (1, EMBED), jnp.float32),
        "w1": scale * jax.random.normal(ks[5], (EMBED, HIDDEN), jnp.float32),
        "b1": scale * jax.random.normal(ks[6], (1, HIDDEN), jnp.float32),
        "w2": scale * jax.random.normal(ks[7], (HIDDEN, EMBED), jnp.float32),
        "b2": jnp.zeros((1, EMBED), jnp.float32),
        # nn.LayerNorm defaults: weight=1, bias=0
        "g1": jnp.ones((1, EMBED), jnp.float32),
        "be1": jnp.zeros((1, EMBED), jnp.float32),
        "g2": jnp.ones((1, EMBED), jnp.float32),
        "be2": jnp.zeros((1, EMBED), jnp.float32),
    }
    return p


def reference_block(value, key, query, p):
    """Pure-JAX reference matching the PyTorch forward (mask=None, eval-mode dropout)."""
    N, S, E = query.shape
    V = value @ p["wv"]
    K = key @ p["wk"]
    Q = query @ p["wq"]
    Vh = V.reshape(N, S, HEADS, HEAD_DIM)
    Kh = K.reshape(N, S, HEADS, HEAD_DIM)
    Qh = Q.reshape(N, S, HEADS, HEAD_DIM)
    energy = jnp.einsum("nqhd,nkhd->nhqk", Qh, Kh)
    attn = jax.nn.softmax(energy / (HEAD_DIM ** 0.5), axis=3)
    out = jnp.einsum("nhql,nlhd->nqhd", attn, Vh).reshape(N, S, E)
    attn_out = out @ p["wo"] + p["bo"]

    def ln(x, g, b):
        mu = jnp.mean(x, axis=-1, keepdims=True)
        var = jnp.mean((x - mu) ** 2, axis=-1, keepdims=True)
        return (x - mu) / jnp.sqrt(var + LN_EPS) * g + b

    x = ln(attn_out + query, p["g1"], p["be1"])
    ff = jnp.maximum(x @ p["w1"] + p["b1"], 0.0) @ p["w2"] + p["b2"]
    return ln(ff + x, p["g2"], p["be2"])


if __name__ == "__main__":
    rng = jax.random.PRNGKey(0)
    k_params, k_v, k_k, k_q = jax.random.split(rng, 4)
    params = init_params(k_params)

    value = jax.random.normal(k_v, (BATCH, SEQ, EMBED), jnp.float32)
    key = jax.random.normal(k_k, (BATCH, SEQ, EMBED), jnp.float32)
    query = jax.random.normal(k_q, (BATCH, SEQ, EMBED), jnp.float32)

    out = transformer_block(value, key, query, params)
    out = jax.block_until_ready(out)

    ref = reference_block(value, key, query, params)
    # Tolerance loosened from 1e-4 -> 2e-3 because the kernel's softmax uses the EUP
    # approximate reciprocal (pl.reciprocal(..., approx=True)); any structural bug would
    # produce errors far above this bound.
    np.testing.assert_allclose(np.asarray(out), np.asarray(ref), rtol=2e-3, atol=2e-3)

    print("KERNEL_OK")
</pallas_src>

<mosaic_0001>
module attributes {stable_mosaic.version = 11 : i64} {
  func.func @transformer_block_kernel(%arg0: i32, %arg1: memref<16x96xf32, #tpu.memory_space<vmem>>, %arg2: memref<96x96xf32, #tpu.memory_space<vmem>>, %arg3: memref<32x32xf32, #tpu.memory_space<vmem>>, %arg4: memref<1x32xf32, #tpu.memory_space<vmem>>, %arg5: memref<32x128xf32, #tpu.memory_space<vmem>>, %arg6: memref<1x128xf32, #tpu.memory_space<vmem>>, %arg7: memref<128x32xf32, #tpu.memory_space<vmem>>, %arg8: memref<1x32xf32, #tpu.memory_space<vmem>>, %arg9: memref<1x32xf32, #tpu.memory_space<vmem>>, %arg10: memref<1x32xf32, #tpu.memory_space<vmem>>, %arg11: memref<1x32xf32, #tpu.memory_space<vmem>>, %arg12: memref<1x32xf32, #tpu.memory_space<vmem>>, %arg13: memref<1x512xf32, #tpu.memory_space<vmem>>) attributes {dimension_semantics = [#tpu.dimension_semantics<arbitrary>], iteration_bounds = array<i64: 1>, scalar_prefetch = 0 : i64, scratch_operands = 0 : i64, tpu.core_type = #tpu.core_type<tc>, window_params = [{pipeline_mode = #tpu.pipeline_mode<synchronous>, transform_indices = @transform_0, window_bounds = array<i64: 16, 96>}, {pipeline_mode = #tpu.pipeline_mode<synchronous>, transform_indices = @transform_1, window_bounds = array<i64: 96, 96>}, {pipeline_mode = #tpu.pipeline_mode<synchronous>, transform_indices = @transform_2, window_bounds = array<i64: 32, 32>}, {pipeline_mode = #tpu.pipeline_mode<synchronous>, transform_indices = @transform_3, window_bounds = array<i64: 1, 32>}, {pipeline_mode = #tpu.pipeline_mode<synchronous>, transform_indices = @transform_4, window_bounds = array<i64: 32, 128>}, {pipeline_mode = #tpu.pipeline_mode<synchronous>, transform_indices = @transform_5, window_bounds = array<i64: 1, 128>}, {pipeline_mode = #tpu.pipeline_mode<synchronous>, transform_indices = @transform_6, window_bounds = array<i64: 128, 32>}, {pipeline_mode = #tpu.pipeline_mode<synchronous>, transform_indices = @transform_7, window_bounds = array<i64: 1, 32>}, {pipeline_mode = #tpu.pipeline_mode<synchronous>, transform_indices = @transform_8, window_bounds = array<i64: 1, 32>}, {pipeline_mode = #tpu.pipeline_mode<synchronous>, transform_indices = @transform_9, window_bounds = array<i64: 1, 32>}, {pipeline_mode = #tpu.pipeline_mode<synchronous>, transform_indices = @transform_10, window_bounds = array<i64: 1, 32>}, {pipeline_mode = #tpu.pipeline_mode<synchronous>, transform_indices = @transform_11, window_bounds = array<i64: 1, 32>}, {pipeline_mode = #tpu.pipeline_mode<synchronous>, transform_indices = @transform_12, window_bounds = array<i64: 1, 512>}]} {
    %c0 = arith.constant 0 : index
    %c0_0 = arith.constant 0 : index
    %0 = vector.load %arg1[%c0, %c0_0] : memref<16x96xf32, #tpu.memory_space<vmem>>, vector<16x96xf32>
    %1 = vector.extract_strided_slice %0 {offsets = [0, 0], sizes = [16, 32], strides = [1, 1]} : vector<16x96xf32> to vector<16x32xf32>
    %c0_1 = arith.constant 0 : index
    %c0_2 = arith.constant 0 : index
    %2 = vector.load %arg2[%c0_1, %c0_2] : memref<96x96xf32, #tpu.memory_space<vmem>>, vector<96x96xf32>
    %cst = arith.constant dense<0.000000e+00> : vector<16x96xf32>
    %3 = tpu.matmul %0, %2, %cst {dimension_numbers = #tpu.dot_dimension_numbers<[1], [0], [0], [1], [0, 0, 1, 1], [], []>} : vector<16x96xf32>, vector<96x96xf32>, vector<16x96xf32> -> vector<16x96xf32>
    %4 = vector.extract_strided_slice %3 {offsets = [0, 0], sizes = [16, 32], strides = [1, 1]} : vector<16x96xf32> to vector<16x32xf32>
    %5 = vector.extract_strided_slice %3 {offsets = [0, 32], sizes = [16, 32], strides = [1, 1]} : vector<16x96xf32> to vector<16x32xf32>
    %6 = vector.extract_strided_slice %3 {offsets = [0, 64], sizes = [16, 32], strides = [1, 1]} : vector<16x96xf32> to vector<16x32xf32>
    %7 = vector.extract_strided_slice %4 {offsets = [0, 0], sizes = [8, 32], strides = [1, 1]} : vector<16x32xf32> to vector<8x32xf32>
    %8 = vector.extract_strided_slice %7 {offsets = [0, 0], sizes = [8, 8], strides = [1, 1]} : vector<8x32xf32> to vector<8x8xf32>
    %9 = vector.extract_strided_slice %7 {offsets = [0, 8], sizes = [8, 8], strides = [1, 1]} : vector<8x32xf32> to vector<8x8xf32>
    %10 = vector.extract_strided_slice %7 {offsets = [0, 16], sizes = [8, 8], strides = [1, 1]} : vector<8x32xf32> to vector<8x8xf32>
    %11 = vector.extract_strided_slice %7 {offsets = [0, 24], sizes = [8, 8], strides = [1, 1]} : vector<8x32xf32> to vector<8x8xf32>
    %12 = vector.extract_strided_slice %4 {offsets = [8, 0], sizes = [8, 32], strides = [1, 1]} : vector<16x32xf32> to vector<8x32xf32>
    %13 = vector.extract_strided_slice %12 {offsets = [0, 0], sizes = [8, 8], strides = [1, 1]} : vector<8x32xf32> to vector<8x8xf32>
    %14 = vector.extract_strided_slice %12 {offsets = [0, 8], sizes = [8, 8], strides = [1, 1]} : vector<8x32xf32> to vector<8x8xf32>
    %15 = vector.extract_strided_slice %12 {offsets = [0, 16], sizes = [8, 8], strides = [1, 1]} : vector<8x32xf32> to vector<8x8xf32>
    %16 = vector.extract_strided_slice %12 {offsets = [0, 24], sizes = [8, 8], strides = [1, 1]} : vector<8x32xf32> to vector<8x8xf32>
    %17 = vector.shape_cast %8 : vector<8x8xf32> to vector<1x8x8xf32>
    %18 = vector.shape_cast %9 : vector<8x8xf32> to vector<1x8x8xf32>
    %19 = vector.shape_cast %10 : vector<8x8xf32> to vector<1x8x8xf32>
    %20 = vector.shape_cast %11 : vector<8x8xf32> to vector<1x8x8xf32>
    %21 = vector.shape_cast %13 : vector<8x8xf32> to vector<1x8x8xf32>
    %22 = vector.shape_cast %14 : vector<8x8xf32> to vector<1x8x8xf32>
    %23 = vector.shape_cast %15 : vector<8x8xf32> to vector<1x8x8xf32>
    %24 = vector.shape_cast %16 : vector<8x8xf32> to vector<1x8x8xf32>
    %25 = tpu.concatenate %17, %18, %19, %20, %21, %22, %23, %24 in 0 : vector<1x8x8xf32>, vector<1x8x8xf32>, vector<1x8x8xf32>, vector<1x8x8xf32>, vector<1x8x8xf32>, vector<1x8x8xf32>, vector<1x8x8xf32>, vector<1x8x8xf32> -> vector<8x8x8xf32>
    %26 = vector.extract_strided_slice %5 {offsets = [0, 0], sizes = [8, 32], strides = [1, 1]} : vector<16x32xf32> to vector<8x32xf32>
    %27 = vector.extract_strided_slice %26 {offsets = [0, 0], sizes = [8, 8], strides = [1, 1]} : vector<8x32xf32> to vector<8x8xf32>
    %28 = vector.extract_strided_slice %26 {offsets = [0, 8], sizes = [8, 8], strides = [1, 1]} : vector<8x32xf32> to vector<8x8xf32>
    %29 = vector.extract_strided_slice %26 {offsets = [0, 16], sizes = [8, 8], strides = [1, 1]} : vector<8x32xf32> to vector<8x8xf32>
    %30 = vector.extract_strided_slice %26 {offsets = [0, 24], sizes = [8, 8], strides = [1, 1]} : vector<8x32xf32> to vector<8x8xf32>
    %31 = vector.extract_strided_slice %5 {offsets = [8, 0], sizes = [8, 32], strides = [1, 1]} : vector<16x32xf32> to vector<8x32xf32>
    %32 = vector.extract_strided_slice %31 {offsets = [0, 0], sizes = [8, 8], strides = [1, 1]} : vector<8x32xf32> to vector<8x8xf32>
    %33 = vector.extract_strided_slice %31 {offsets = [0, 8], sizes = [8, 8], strides = [1, 1]} : vector<8x32xf32> to vector<8x8xf32>
    %34 = vector.extract_strided_slice %31 {offsets = [0, 16], sizes = [8, 8], strides = [1, 1]} : vector<8x32xf32> to vector<8x8xf32>
    %35 = vector.extract_strided_slice %31 {offsets = [0, 24], sizes = [8, 8], strides = [1, 1]} : vector<8x32xf32> to vector<8x8xf32>
    %36 = vector.shape_cast %27 : vector<8x8xf32> to vector<1x8x8xf32>
    %37 = vector.shape_cast %28 : vector<8x8xf32> to vector<1x8x8xf32>
    %38 = vector.shape_cast %29 : vector<8x8xf32> to vector<1x8x8xf32>
    %39 = vector.shape_cast %30 : vector<8x8xf32> to vector<1x8x8xf32>
    %40 = vector.shape_cast %32 : vector<8x8xf32> to vector<1x8x8xf32>
    %41 = vector.shape_cast %33 : vector<8x8xf32> to vector<1x8x8xf32>
    %42 = vector.shape_cast %34 : vector<8x8xf32> to vector<1x8x8xf32>
    %43 = vector.shape_cast %35 : vector<8x8xf32> to vector<1x8x8xf32>
    %44 = tpu.concatenate %36, %37, %38, %39, %40, %41, %42, %43 in 0 : vector<1x8x8xf32>, vector<1x8x8xf32>, vector<1x8x8xf32>, vector<1x8x8xf32>, vector<1x8x8xf32>, vector<1x8x8xf32>, vector<1x8x8xf32>, vector<1x8x8xf32> -> vector<8x8x8xf32>
    %45 = vector.extract_strided_slice %6 {offsets = [0, 0], sizes = [8, 32], strides = [1, 1]} : vector<16x32xf32> to vector<8x32xf32>
    %46 = vector.extract_strided_slice %45 {offsets = [0, 0], sizes = [8, 8], strides = [1, 1]} : vector<8x32xf32> to vector<8x8xf32>
    %47 = vector.extract_strided_slice %45 {offsets = [0, 8], sizes = [8, 8], strides = [1, 1]} : vector<8x32xf32> to vector<8x8xf32>
    %48 = vector.extract_strided_slice %45 {offsets = [0, 16], sizes = [8, 8], strides = [1, 1]} : vector<8x32xf32> to vector<8x8xf32>
    %49 = vector.extract_strided_slice %45 {offsets = [0, 24], sizes = [8, 8], strides = [1, 1]} : vector<8x32xf32> to vector<8x8xf32>
    %50 = vector.extract_strided_slice %6 {offsets = [8, 0], sizes = [8, 32], strides = [1, 1]} : vector<16x32xf32> to vector<8x32xf32>
    %51 = vector.extract_strided_slice %50 {offsets = [0, 0], sizes = [8, 8], strides = [1, 1]} : vector<8x32xf32> to vector<8x8xf32>
    %52 = vector.extract_strided_slice %50 {offsets = [0, 8], sizes = [8, 8], strides = [1, 1]} : vector<8x32xf32> to vector<8x8xf32>
    %53 = vector.extract_strided_slice %50 {offsets = [0, 16], sizes = [8, 8], strides = [1, 1]} : vector<8x32xf32> to vector<8x8xf32>
    %54 = vector.extract_strided_slice %50 {offsets = [0, 24], sizes = [8, 8], strides = [1, 1]} : vector<8x32xf32> to vector<8x8xf32>
    %55 = vector.shape_cast %46 : vector<8x8xf32> to vector<1x8x8xf32>
    %56 = vector.shape_cast %47 : vector<8x8xf32> to vector<1x8x8xf32>
    %57 = vector.shape_cast %48 : vector<8x8xf32> to vector<1x8x8xf32>
    %58 = vector.shape_cast %49 : vector<8x8xf32> to vector<1x8x8xf32>
    %59 = vector.shape_cast %51 : vector<8x8xf32> to vector<1x8x8xf32>
    %60 = vector.shape_cast %52 : vector<8x8xf32> to vector<1x8x8xf32>
    %61 = vector.shape_cast %53 : vector<8x8xf32> to vector<1x8x8xf32>
    %62 = vector.shape_cast %54 : vector<8x8xf32> to vector<1x8x8xf32>
    %63 = tpu.concatenate %55, %56, %57, %58, %59, %60, %61, %62 in 0 : vector<1x8x8xf32>, vector<1x8x8xf32>, vector<1x8x8xf32>, vector<1x8x8xf32>, vector<1x8x8xf32>, vector<1x8x8xf32>, vector<1x8x8xf32>, vector<1x8x8xf32> -> vector<8x8x8xf32>
    "tpu.trace_start"() <{level = 10 : i32, message = "bqd,bkd->bqk"}> : () -> ()
    %cst_3 = arith.constant dense<0.000000e+00> : vector<8x8x8xf32>
    %64 = tpu.matmul %25, %44, %cst_3 {dimension_numbers = #tpu.dot_dimension_numbers<[2], [2], [1], [1], [0, 0, 0, 1, 1, 1], [0], [0]>} : vector<8x8x8xf32>, vector<8x8x8xf32>, vector<8x8x8xf32> -> vector<8x8x8xf32>
    "tpu.trace_stop"() : () -> ()
    %cst_4 = arith.constant 0.353553385 : f32
    %65 = vector.broadcast %cst_4 : f32 to vector<8x8x8xf32>
    %66 = arith.mulf %64, %65 : vector<8x8x8xf32>
    %cst_5 = arith.constant dense<0xFF800000> : vector<8x8xf32>
    %67 = vector.multi_reduction <maximumf>, %66, %cst_5 [2] : vector<8x8x8xf32> to vector<8x8xf32>
    %68 = vector.shape_cast %67 : vector<8x8xf32> to vector<8x8x1xf32>
    %69 = vector.broadcast %68 : vector<8x8x1xf32> to vector<8x8x8xf32>
    %70 = arith.subf %66, %69 : vector<8x8x8xf32>
    %71 = math.exp %70 : vector<8x8x8xf32>
    %cst_6 = arith.constant dense<0.000000e+00> : vector<8x8xf32>
    %72 = vector.multi_reduction <add>, %71, %cst_6 [2] : vector<8x8x8xf32> to vector<8x8xf32>
    %73 = vector.shape_cast %72 : vector<8x8xf32> to vector<8x8x1xf32>
    %74 = tpu.reciprocal %73 {approx = true} : vector<8x8x1xf32> -> vector<8x8x1xf32>
    %75 = vector.broadcast %74 : vector<8x8x1xf32> to vector<8x8x8xf32>
    %76 = arith.mulf %71, %75 : vector<8x8x8xf32>
    "tpu.trace_start"() <{level = 10 : i32, message = "bqk,bkd->bqd"}> : () -> ()
    %cst_7 = arith.constant dense<0.000000e+00> : vector<8x8x8xf32>
    %77 = tpu.matmul %76, %63, %cst_7 {dimension_numbers = #tpu.dot_dimension_numbers<[2], [1], [1], [2], [0, 0, 0, 1, 1, 2], [0], [0]>} : vector<8x8x8xf32>, vector<8x8x8xf32>, vector<8x8x8xf32> -> vector<8x8x8xf32>
    "tpu.trace_stop"() : () -> ()
    %78 = vector.extract_strided_slice %77 {offsets = [0, 0, 0], sizes = [1, 8, 8], strides = [1, 1, 1]} : vector<8x8x8xf32> to vector<1x8x8xf32>
    %79 = vector.shape_cast %78 : vector<1x8x8xf32> to vector<8x8xf32>
    %80 = vector.extract_strided_slice %77 {offsets = [1, 0, 0], sizes = [1, 8, 8], strides = [1, 1, 1]} : vector<8x8x8xf32> to vector<1x8x8xf32>
    %81 = vector.shape_cast %80 : vector<1x8x8xf32> to vector<8x8xf32>
    %82 = vector.extract_strided_slice %77 {offsets = [2, 0, 0], sizes = [1, 8, 8], strides = [1, 1, 1]} : vector<8x8x8xf32> to vector<1x8x8xf32>
    %83 = vector.shape_cast %82 : vector<1x8x8xf32> to vector<8x8xf32>
    %84 = vector.extract_strided_slice %77 {offsets = [3, 0, 0], sizes = [1, 8, 8], strides = [1, 1, 1]} : vector<8x8x8xf32> to vector<1x8x8xf32>
    %85 = vector.shape_cast %84 : vector<1x8x8xf32> to vector<8x8xf32>
    %86 = tpu.concatenate %79, %81, %83, %85 in 1 : vector<8x8xf32>, vector<8x8xf32>, vector<8x8xf32>, vector<8x8xf32> -> vector<8x32xf32>
    %87 = vector.extract_strided_slice %77 {offsets = [4, 0, 0], sizes = [1, 8, 8], strides = [1, 1, 1]} : vector<8x8x8xf32> to vector<1x8x8xf32>
    %88 = vector.shape_cast %87 : vector<1x8x8xf32> to vector<8x8xf32>
    %89 = vector.extract_strided_slice %77 {offsets = [5, 0, 0], sizes = [1, 8, 8], strides = [1, 1, 1]} : vector<8x8x8xf32> to vector<1x8x8xf32>
    %90 = vector.shape_cast %89 : vector<1x8x8xf32> to vector<8x8xf32>
    %91 = vector.extract_strided_slice %77 {offsets = [6, 0, 0], sizes = [1, 8, 8], strides = [1, 1, 1]} : vector<8x8x8xf32> to vector<1x8x8xf32>
    %92 = vector.shape_cast %91 : vector<1x8x8xf32> to vector<8x8xf32>
    %93 = vector.extract_strided_slice %77 {offsets = [7, 0, 0], sizes = [1, 8, 8], strides = [1, 1, 1]} : vector<8x8x8xf32> to vector<1x8x8xf32>
    %94 = vector.shape_cast %93 : vector<1x8x8xf32> to vector<8x8xf32>
    %95 = tpu.concatenate %88, %90, %92, %94 in 1 : vector<8x8xf32>, vector<8x8xf32>, vector<8x8xf32>, vector<8x8xf32> -> vector<8x32xf32>
    %96 = tpu.concatenate %86, %95 in 0 : vector<8x32xf32>, vector<8x32xf32> -> vector<16x32xf32>
    %c0_8 = arith.constant 0 : index
    %c0_9 = arith.constant 0 : index
    %97 = vector.load %arg3[%c0_8, %c0_9] : memref<32x32xf32, #tpu.memory_space<vmem>>, vector<32x32xf32>
    %cst_10 = arith.constant dense<0.000000e+00> : vector<16x32xf32>
    %98 = tpu.matmul %96, %97, %cst_10 {dimension_numbers = #tpu.dot_dimension_numbers<[1], [0], [0], [1], [0, 0, 1, 1], [], []>} : vector<16x32xf32>, vector<32x32xf32>, vector<16x32xf32> -> vector<16x32xf32>
    %c0_11 = arith.constant 0 : index
    %c0_12 = arith.constant 0 : index
    %99 = vector.load %arg4[%c0_11, %c0_12] : memref<1x32xf32, #tpu.memory_space<vmem>>, vector<1x32xf32>
    %100 = vector.broadcast %99 : vector<1x32xf32> to vector<16x32xf32>
    %101 = arith.addf %98, %100 : vector<16x32xf32>
    %102 = arith.addf %101, %1 : vector<16x32xf32>
    %c0_13 = arith.constant 0 : index
    %c0_14 = arith.constant 0 : index
    %103 = vector.load %arg9[%c0_13, %c0_14] : memref<1x32xf32, #tpu.memory_space<vmem>>, vector<1x32xf32>
    %c0_15 = arith.constant 0 : index
    %c0_16 = arith.constant 0 : index
    %104 = vector.load %arg10[%c0_15, %c0_16] : memref<1x32xf32, #tpu.memory_space<vmem>>, vector<1x32xf32>
    %cst_17 = arith.constant dense<0.000000e+00> : vector<16xf32>
    %105 = vector.multi_reduction <add>, %102, %cst_17 [1] : vector<16x32xf32> to vector<16xf32>
    %106 = vector.shape_cast %105 : vector<16xf32> to vector<16x1xf32>
    %cst_18 = arith.constant 3.200000e+01 : f32
    %107 = vector.broadcast %cst_18 : f32 to vector<16x1xf32>
    %108 = arith.divf %106, %107 : vector<16x1xf32>
    %109 = vector.broadcast %108 : vector<16x1xf32> to vector<16x32xf32>
    %110 = arith.subf %102, %109 : vector<16x32xf32>
    %111 = arith.mulf %110, %110 : vector<16x32xf32>
    %cst_19 = arith.constant dense<0.000000e+00> : vector<16xf32>
    %112 = vector.multi_reduction <add>, %111, %cst_19 [1] : vector<16x32xf32> to vector<16xf32>
    %113 = vector.shape_cast %112 : vector<16xf32> to vector<16x1xf32>
    %cst_20 = arith.constant 3.200000e+01 : f32
    %114 = vector.broadcast %cst_20 : f32 to vector<16x1xf32>
    %115 = arith.divf %113, %114 : vector<16x1xf32>
    %116 = vector.broadcast %108 : vector<16x1xf32> to vector<16x32xf32>
    %117 = arith.subf %102, %116 : vector<16x32xf32>
    %cst_21 = arith.constant 9.99999974E-6 : f32
    %118 = vector.broadcast %cst_21 : f32 to vector<16x1xf32>
    %119 = arith.addf %115, %118 : vector<16x1xf32>
    %120 = math.rsqrt %119 : vector<16x1xf32>
    %121 = vector.broadcast %120 : vector<16x1xf32> to vector<16x32xf32>
    %122 = arith.mulf %117, %121 : vector<16x32xf32>
    %123 = vector.broadcast %103 : vector<1x32xf32> to vector<16x32xf32>
    %124 = arith.mulf %122, %123 : vector<16x32xf32>
    %125 = vector.broadcast %104 : vector<1x32xf32> to vector<16x32xf32>
    %126 = arith.addf %124, %125 : vector<16x32xf32>
    %c0_22 = arith.constant 0 : index
    %c0_23 = arith.constant 0 : index
    %127 = vector.load %arg5[%c0_22, %c0_23] : memref<32x128xf32, #tpu.memory_space<vmem>>, vector<32x128xf32>
    %cst_24 = arith.constant dense<0.000000e+00> : vector<16x128xf32>
    %128 = tpu.matmul %126, %127, %cst_24 {dimension_numbers = #tpu.dot_dimension_numbers<[1], [0], [0], [1], [0, 0, 1, 1], [], []>} : vector<16x32xf32>, vector<32x128xf32>, vector<16x128xf32> -> vector<16x128xf32>
    %c0_25 = arith.constant 0 : index
    %c0_26 = arith.constant 0 : index
    %129 = vector.load %arg6[%c0_25, %c0_26] : memref<1x128xf32, #tpu.memory_space<vmem>>, vector<1x128xf32>
    %130 = vector.broadcast %129 : vector<1x128xf32> to vector<16x128xf32>
    %131 = arith.addf %128, %130 : vector<16x128xf32>
    %cst_27 = arith.constant 0.000000e+00 : f32
    %132 = vector.broadcast %cst_27 : f32 to vector<16x128xf32>
    %133 = arith.maximumf %131, %132 : vector<16x128xf32>
    %c0_28 = arith.constant 0 : index
    %c0_29 = arith.constant 0 : index
    %134 = vector.load %arg7[%c0_28, %c0_29] : memref<128x32xf32, #tpu.memory_space<vmem>>, vector<128x32xf32>
    %cst_30 = arith.constant dense<0.000000e+00> : vector<16x32xf32>
    %135 = tpu.matmul %133, %134, %cst_30 {dimension_numbers = #tpu.dot_dimension_numbers<[1], [0], [0], [1], [0, 0, 1, 1], [], []>} : vector<16x128xf32>, vector<128x32xf32>, vector<16x32xf32> -> vector<16x32xf32>
    %c0_31 = arith.constant 0 : index
    %c0_32 = arith.constant 0 : index
    %136 = vector.load %arg8[%c0_31, %c0_32] : memref<1x32xf32, #tpu.memory_space<vmem>>, vector<1x32xf32>
    %137 = vector.broadcast %136 : vector<1x32xf32> to vector<16x32xf32>
    %138 = arith.addf %135, %137 : vector<16x32xf32>
    %139 = arith.addf %138, %126 : vector<16x32xf32>
    %c0_33 = arith.constant 0 : index
    %c0_34 = arith.constant 0 : index
    %140 = vector.load %arg11[%c0_33, %c0_34] : memref<1x32xf32, #tpu.memory_space<vmem>>, vector<1x32xf32>
    %c0_35 = arith.constant 0 : index
    %c0_36 = arith.constant 0 : index
    %141 = vector.load %arg12[%c0_35, %c0_36] : memref<1x32xf32, #tpu.memory_space<vmem>>, vector<1x32xf32>
    %cst_37 = arith.constant dense<0.000000e+00> : vector<16xf32>
    %142 = vector.multi_reduction <add>, %139, %cst_37 [1] : vector<16x32xf32> to vector<16xf32>
    %143 = vector.shape_cast %142 : vector<16xf32> to vector<16x1xf32>
    %cst_38 = arith.constant 3.200000e+01 : f32
    %144 = vector.broadcast %cst_38 : f32 to vector<16x1xf32>
    %145 = arith.divf %143, %144 : vector<16x1xf32>
    %146 = vector.broadcast %145 : vector<16x1xf32> to vector<16x32xf32>
    %147 = arith.subf %139, %146 : vector<16x32xf32>
    %148 = arith.mulf %147, %147 : vector<16x32xf32>
    %cst_39 = arith.constant dense<0.000000e+00> : vector<16xf32>
    %149 = vector.multi_reduction <add>, %148, %cst_39 [1] : vector<16x32xf32> to vector<16xf32>
    %150 = vector.shape_cast %149 : vector<16xf32> to vector<16x1xf32>
    %cst_40 = arith.constant 3.200000e+01 : f32
    %151 = vector.broadcast %cst_40 : f32 to vector<16x1xf32>
    %152 = arith.divf %150, %151 : vector<16x1xf32>
    %153 = vector.broadcast %145 : vector<16x1xf32> to vector<16x32xf32>
    %154 = arith.subf %139, %153 : vector<16x32xf32>
    %cst_41 = arith.constant 9.99999974E-6 : f32
    %155 = vector.broadcast %cst_41 : f32 to vector<16x1xf32>
    %156 = arith.addf %152, %155 : vector<16x1xf32>
    %157 = math.rsqrt %156 : vector<16x1xf32>
    %158 = vector.broadcast %157 : vector<16x1xf32> to vector<16x32xf32>
    %159 = arith.mulf %154, %158 : vector<16x32xf32>
    %160 = vector.broadcast %140 : vector<1x32xf32> to vector<16x32xf32>
    %161 = arith.mulf %159, %160 : vector<16x32xf32>
    %162 = vector.broadcast %141 : vector<1x32xf32> to vector<16x32xf32>
    %163 = arith.addf %161, %162 : vector<16x32xf32>
    %164 = vector.extract_strided_slice %163 {offsets = [0, 0], sizes = [1, 32], strides = [1, 1]} : vector<16x32xf32> to vector<1x32xf32>
    %165 = vector.extract_strided_slice %163 {offsets = [1, 0], sizes = [1, 32], strides = [1, 1]} : vector<16x32xf32> to vector<1x32xf32>
    %166 = vector.extract_strided_slice %163 {offsets = [2, 0], sizes = [1, 32], strides = [1, 1]} : vector<16x32xf32> to vector<1x32xf32>
    %167 = vector.extract_strided_slice %163 {offsets = [3, 0], sizes = [1, 32], strides = [1, 1]} : vector<16x32xf32> to vector<1x32xf32>
    %168 = vector.extract_strided_slice %163 {offsets = [4, 0], sizes = [1, 32], strides = [1, 1]} : vector<16x32xf32> to vector<1x32xf32>
    %169 = vector.extract_strided_slice %163 {offsets = [5, 0], sizes = [1, 32], strides = [1, 1]} : vector<16x32xf32> to vector<1x32xf32>
    %170 = vector.extract_strided_slice %163 {offsets = [6, 0], sizes = [1, 32], strides = [1, 1]} : vector<16x32xf32> to vector<1x32xf32>
    %171 = vector.extract_strided_slice %163 {offsets = [7, 0], sizes = [1, 32], strides = [1, 1]} : vector<16x32xf32> to vector<1x32xf32>
    %172 = vector.extract_strided_slice %163 {offsets = [8, 0], sizes = [1, 32], strides = [1, 1]} : vector<16x32xf32> to vector<1x32xf32>
    %173 = vector.extract_strided_slice %163 {offsets = [9, 0], sizes = [1, 32], strides = [1, 1]} : vector<16x32xf32> to vector<1x32xf32>
    %174 = vector.extract_strided_slice %163 {offsets = [10, 0], sizes = [1, 32], strides = [1, 1]} : vector<16x32xf32> to vector<1x32xf32>
    %175 = vector.extract_strided_slice %163 {offsets = [11, 0], sizes = [1, 32], strides = [1, 1]} : vector<16x32xf32> to vector<1x32xf32>
    %176 = vector.extract_strided_slice %163 {offsets = [12, 0], sizes = [1, 32], strides = [1, 1]} : vector<16x32xf32> to vector<1x32xf32>
    %177 = vector.extract_strided_slice %163 {offsets = [13, 0], sizes = [1, 32], strides = [1, 1]} : vector<16x32xf32> to vector<1x32xf32>
    %178 = vector.extract_strided_slice %163 {offsets = [14, 0], sizes = [1, 32], strides = [1, 1]} : vector<16x32xf32> to vector<1x32xf32>
    %179 = vector.extract_strided_slice %163 {offsets = [15, 0], sizes = [1, 32], strides = [1, 1]} : vector<16x32xf32> to vector<1x32xf32>
    %180 = tpu.concatenate %164, %165, %166, %167, %168, %169, %170, %171, %172, %173, %174, %175, %176, %177, %178, %179 in 1 : vector<1x32xf32>, vector<1x32xf32>, vector<1x32xf32>, vector<1x32xf32>, vector<1x32xf32>, vector<1x32xf32>, vector<1x32xf32>, vector<1x32xf32>, vector<1x32xf32>, vector<1x32xf32>, vector<1x32xf32>, vector<1x32xf32>, vector<1x32xf32>, vector<1x32xf32>, vector<1x32xf32>, vector<1x32xf32> -> vector<1x512xf32>
    %c0_42 = arith.constant 0 : index
    %c0_43 = arith.constant 0 : index
    %181 = vector.load %arg13[%c0_42, %c0_43] : memref<1x512xf32, #tpu.memory_space<vmem>>, vector<1x512xf32>
    tpu.vector_store %arg13[%c0_42, %c0_43], %180 {strides = array<i32>} : memref<1x512xf32, #tpu.memory_space<vmem>>, vector<1x512xf32>,
    return
  }
  func.func @transform_0(%arg0: i32) -> (i32, i32) {
    %c0_i32 = arith.constant 0 : i32
    %c0_i32_0 = arith.constant 0 : i32
    %c0_i32_1 = arith.constant 0 : i32
    return %c0_i32, %c0_i32_0 : i32, i32
  }
  func.func @transform_1(%arg0: i32) -> (i32, i32) {
    %c0_i32 = arith.constant 0 : i32
    %c0_i32_0 = arith.constant 0 : i32
    %c0_i32_1 = arith.constant 0 : i32
    return %c0_i32, %c0_i32_0 : i32, i32
  }
  func.func @transform_2(%arg0: i32) -> (i32, i32) {
    %c0_i32 = arith.constant 0 : i32
    %c0_i32_0 = arith.constant 0 : i32
    %c0_i32_1 = arith.constant 0 : i32
    return %c0_i32, %c0_i32_0 : i32, i32
  }
  func.func @transform_3(%arg0: i32) -> (i32, i32) {
    %c0_i32 = arith.constant 0 : i32
    %c0_i32_0 = arith.constant 0 : i32
    %c0_i32_1 = arith.constant 0 : i32
    return %c0_i32, %c0_i32_0 : i32, i32
  }
  func.func @transform_4(%arg0: i32) -> (i32, i32) {
    %c0_i32 = arith.constant 0 : i32
    %c0_i32_0 = arith.constant 0 : i32
    %c0_i32_1 = arith.constant 0 : i32
    return %c0_i32, %c0_i32_0 : i32, i32
  }
  func.func @transform_5(%arg0: i32) -> (i32, i32) {
    %c0_i32 = arith.constant 0 : i32
    %c0_i32_0 = arith.constant 0 : i32
    %c0_i32_1 = arith.constant 0 : i32
    return %c0_i32, %c0_i32_0 : i32, i32
  }
  func.func @transform_6(%arg0: i32) -> (i32, i32) {
    %c0_i32 = arith.constant 0 : i32
    %c0_i32_0 = arith.constant 0 : i32
    %c0_i32_1 = arith.constant 0 : i32
    return %c0_i32, %c0_i32_0 : i32, i32
  }
  func.func @transform_7(%arg0: i32) -> (i32, i32) {
    %c0_i32 = arith.constant 0 : i32
    %c0_i32_0 = arith.constant 0 : i32
    %c0_i32_1 = arith.constant 0 : i32
    return %c0_i32, %c0_i32_0 : i32, i32
  }
  func.func @transform_8(%arg0: i32) -> (i32, i32) {
    %c0_i32 = arith.constant 0 : i32
    %c0_i32_0 = arith.constant 0 : i32
    %c0_i32_1 = arith.constant 0 : i32
    return %c0_i32, %c0_i32_0 : i32, i32
  }
  func.func @transform_9(%arg0: i32) -> (i32, i32) {
    %c0_i32 = arith.constant 0 : i32
    %c0_i32_0 = arith.constant 0 : i32
    %c0_i32_1 = arith.constant 0 : i32
    return %c0_i32, %c0_i32_0 : i32, i32
  }
  func.func @transform_10(%arg0: i32) -> (i32, i32) {
    %c0_i32 = arith.constant 0 : i32
    %c0_i32_0 = arith.constant 0 : i32
    %c0_i32_1 = arith.constant 0 : i32
    return %c0_i32, %c0_i32_0 : i32, i32
  }
  func.func @transform_11(%arg0: i32) -> (i32, i32) {
    %c0_i32 = arith.constant 0 : i32
    %c0_i32_0 = arith.constant 0 : i32
    %c0_i32_1 = arith.constant 0 : i32
    return %c0_i32, %c0_i32_0 : i32, i32
  }
  func.func @transform_12(%arg0: i32) -> (i32, i32) {
    %c0_i32 = arith.constant 0 : i32
    %c0_i32_0 = arith.constant 0 : i32
    %c0_i32_1 = arith.constant 0 : i32
    return %c0_i32, %c0_i32_0 : i32, i32
  }
}

</mosaic_0001>

<llo_original>
// kernel: tpu_custom_call.1
$region0: #{tpu_custom_call.1}
  #allocation0 [shape = 'u32[]', space=smem, size = 0x4, offset = 0x4, fixed_abs, tag = 'smem constant byte address 0x4 - core index']
  #allocation1 [shape = 'u32[144,128]{1,0:T(1,128)}', space=vmem, size = 0x12000, scoped, tag = 'internal scratch']
  %s0 = inlined_call_operand.hbm [shape: f32[16,96], index: 0, kind: input, shape index: {}]
  %s1 = inlined_call_operand.vmem [shape: f32[96,96], index: 1, kind: input, shape index: {}]
  %s2 = inlined_call_operand.vmem [shape: f32[32,32], index: 2, kind: input, shape index: {}]
  %s3 = inlined_call_operand.vmem [shape: f32[1,32], index: 3, kind: input, shape index: {}]
  %s4 = inlined_call_operand.vmem [shape: f32[32,128], index: 4, kind: input, shape index: {}]
  %s5 = inlined_call_operand.vmem [shape: f32[1,128], index: 5, kind: input, shape index: {}]
  %s6 = inlined_call_operand.vmem [shape: f32[128,32], index: 6, kind: input, shape index: {}]
  %s7 = inlined_call_operand.vmem [shape: f32[1,32], index: 7, kind: input, shape index: {}]
  %s8 = inlined_call_operand.vmem [shape: f32[1,32], index: 8, kind: input, shape index: {}]
  %s9 = inlined_call_operand.vmem [shape: f32[1,32], index: 9, kind: input, shape index: {}]
  %s10 = inlined_call_operand.vmem [shape: f32[1,32], index: 10, kind: input, shape index: {}]
  %s11 = inlined_call_operand.vmem [shape: f32[1,32], index: 11, kind: input, shape index: {}]
  %s12 = inlined_call_operand.hbm [shape: f32[1,512], index: 12, kind: output, shape index: {}]
  %s13 = sld [smem:[#allocation0]]
  $region62: #{tpu_custom_call.1} parent=0
    _
  %s15 = ssub.s32 1, %s13
  %s16 = scalar_select 0, %s15, %s13
  $region1: #{tpu_custom_call.1} parent=0
    #allocation2 [shape = 'u8[8192]{0}', space=vmem, size = 0x2000, scoped, tag = 'input window, operand 0, single buffered']
    #allocation3 [shape = 's32[1]{0}', space=sflag, size = 0x4, scoped, tag = 'scoped memory for tpu_custom_call.1']
    #allocation4 [shape = 's32[1]{0}', space=sflag, size = 0x4, scoped, tag = 'scoped memory for tpu_custom_call.1']
    #allocation5 [shape = 'u8[2048]{0}', space=vmem, size = 0x800, scoped, tag = 'output window, operand 0, single buffered']
    %17 = vsyncpa [#allocation3], 0
    %18 = vsyncpa [#allocation4], 0
    // Predicated region
    $region2: #{tpu_custom_call.1} parent=1 // pred_check
      _
    $region3: #{tpu_custom_call.1} parent=1 // pred_check_branch
      %20 = sbr.rel (0) target = $region5
    $region4: #{tpu_custom_call.1} parent=1 // pred_region
      %s22 = ssub.s32 256, 256
      %23 = vsyncadd [#allocation3], %s22
      %s24 = sshll.u32 [#allocation2], 4
      %s25 = int_to_ptr.vmem [resolvable:$true] %s24
      %30 = dma.hbm_to_vmem [thread:$0]  %s0, 256, %s25, [#allocation3], 128, 128, 8
    $region5: #{tpu_custom_call.1} parent=1 // pred_fallthru
      _
    // Predicated region
    $region6: #{tpu_custom_call.1} parent=1 // pred_check
      _
    $region7: #{tpu_custom_call.1} parent=1 // pred_check_branch
      %32 = sbr.rel (0) target = $region9
    $region8: #{tpu_custom_call.1} parent=1 // pred_region
      _
    $region9: #{tpu_custom_call.1} parent=1 // pred_fallthru
      _
    // Predicated region
    $region10: #{tpu_custom_call.1} parent=1 // pred_check
      _
    $region11: #{tpu_custom_call.1} parent=1 // pred_check_branch
      %34 = sbr.rel (0) target = $region13
    $region12: #{tpu_custom_call.1} parent=1 // pred_region
      _
    $region13: #{tpu_custom_call.1} parent=1 // pred_fallthru
      _
    // Predicated region
    $region14: #{tpu_custom_call.1} parent=1 // pred_check
      _
    $region15: #{tpu_custom_call.1} parent=1 // pred_check_branch
      %36 = sbr.rel (0) target = $region17
    $region16: #{tpu_custom_call.1} parent=1 // pred_region
      _
    $region17: #{tpu_custom_call.1} parent=1 // pred_fallthru
      _
    // Predicated region
    $region18: #{tpu_custom_call.1} parent=1 // pred_check
      _
    $region19: #{tpu_custom_call.1} parent=1 // pred_check_branch
      %38 = sbr.rel (0) target = $region21
    $region20: #{tpu_custom_call.1} parent=1 // pred_region
      _
    $region21: #{tpu_custom_call.1} parent=1 // pred_fallthru
      _
    // Predicated region
    $region22: #{tpu_custom_call.1} parent=1 // pred_check
      _
    $region23: #{tpu_custom_call.1} parent=1 // pred_check_branch
      %40 = sbr.rel (0) target = $region25
    $region24: #{tpu_custom_call.1} parent=1 // pred_region
      _
    $region25: #{tpu_custom_call.1} parent=1 // pred_fallthru
      _
    // Predicated region
    $region26: #{tpu_custom_call.1} parent=1 // pred_check
      _
    $region27: #{tpu_custom_call.1} parent=1 // pred_check_branch
      %42 = sbr.rel (0) target = $region29
    $region28: #{tpu_custom_call.1} parent=1 // pred_region
      _
    $region29: #{tpu_custom_call.1} parent=1 // pred_fallthru
      _
    // Predicated region
    $region30: #{tpu_custom_call.1} parent=1 // pred_check
      _
    $region31: #{tpu_custom_call.1} parent=1 // pred_check_branch
      %44 = sbr.rel (0) target = $region33
    $region32: #{tpu_custom_call.1} parent=1 // pred_region
      _
    $region33: #{tpu_custom_call.1} parent=1 // pred_fallthru
      _
    // Predicated region
    $region34: #{tpu_custom_call.1} parent=1 // pred_check
      _
    $region35: #{tpu_custom_call.1} parent=1 // pred_check_branch
      %46 = sbr.rel (0) target = $region37
    $region36: #{tpu_custom_call.1} parent=1 // pred_region
      _
    $region37: #{tpu_custom_call.1} parent=1 // pred_fallthru
      _
    // Predicated region
    $region38: #{tpu_custom_call.1} parent=1 // pred_check
      _
    $region39: #{tpu_custom_call.1} parent=1 // pred_check_branch
      %48 = sbr.rel (0) target = $region41
    $region40: #{tpu_custom_call.1} parent=1 // pred_region
      _
    $region41: #{tpu_custom_call.1} parent=1 // pred_fallthru
      _
    // Predicated region
    $region42: #{tpu_custom_call.1} parent=1 // pred_check
      _
    $region43: #{tpu_custom_call.1} parent=1 // pred_check_branch
      %50 = sbr.rel (0) target = $region45
    $region44: #{tpu_custom_call.1} parent=1 // pred_region
      _
    $region45: #{tpu_custom_call.1} parent=1 // pred_fallthru
      _
    // Predicated region
    $region46: #{tpu_custom_call.1} parent=1 // pred_check
      _
    $region47: #{tpu_custom_call.1} parent=1 // pred_check_branch
      %52 = sbr.rel (0) target = $region49
    $region48: #{tpu_custom_call.1} parent=1 // pred_region
      _
    $region49: #{tpu_custom_call.1} parent=1 // pred_fallthru
      _
    // Predicated region
    $region50: #{tpu_custom_call.1} parent=1 // pred_check
      _
    $region51: #{tpu_custom_call.1} parent=1 // pred_check_branch
      %54 = sbr.rel (0) target = $region53
    $region52: #{tpu_custom_call.1} parent=1 // pred_region
      %55 = dma.done [#allocation3], 256
    $region53: #{tpu_custom_call.1} parent=1 // pred_fallthru
      _
    %v56 = vld [vmem:[#allocation2] sm:$0xff]
    %v57 = vld [vmem:[#allocation2 + $0x8] sm:$0xff]
    %v58 = vld [vmem:[%s1] sm:$0xff]
    %v59 = vld [vmem:[%s1 + $0x8] sm:$0xff]
    %v60 = vld [vmem:[%s1 + $0x10] sm:$0xff]
    %v61 = vld [vmem:[%s1 + $0x18] sm:$0xff]
    %v62 = vld [vmem:[%s1 + $0x20] sm:$0xff]
    %v63 = vld [vmem:[%s1 + $0x28] sm:$0xff]
    %v64 = vld [vmem:[%s1 + $0x30] sm:$0xff]
    %v65 = vld [vmem:[%s1 + $0x38] sm:$0xff]
    %v66 = vld [vmem:[%s1 + $0x40] sm:$0xff]
    %v67 = vld [vmem:[%s1 + $0x48] sm:$0xff]
    %v68 = vld [vmem:[%s1 + $0x50] sm:$0xff]
    %v69 = vld [vmem:[%s1 + $0x58] sm:$0xff]
    %vm70 = vcmask 785408
    %v72 = vsel %vm70, %v56, 0
    %v75 = vsel %vm70, %v57, 0
    %77 = vmatprep.subr.mxu0 0.0
    %78 = vmatpush1.msra.mxu0 %v58
    %79 = vmatprep.subr.mxu0 0.0
    %80 = vmatpush1.msra.mxu0 %v59
    %81 = vmatprep.subr.mxu0 0.0
    %82 = vmatpush1.msra.mxu0 %v60
    %83 = vmatprep.subr.mxu0 0.0
    %84 = vmatpush1.msra.mxu0 %v61
    %85 = vmatprep.subr.mxu0 0.0
    %86 = vmatpush1.msra.mxu0 %v62
    %87 = vmatprep.subr.mxu0 0.0
    %88 = vmatpush1.msra.mxu0 %v63
    %89 = vmatprep.subr.mxu0 0.0
    %90 = vmatpush1.msra.mxu0 %v64
    %91 = vmatprep.subr.mxu0 0.0
    %92 = vmatpush1.msra.mxu0 %v65
    %93 = vmatprep.subr.mxu0 0.0
    %94 = vmatpush1.msra.mxu0 %v66
    %95 = vmatprep.subr.mxu0 0.0
    %96 = vmatpush1.msra.mxu0 %v67
    %97 = vmatprep.subr.mxu0 0.0
    %98 = vmatpush1.msra.mxu0 %v68
    %99 = vmatprep.subr.mxu0 0.0
    %100 = vmatpush1.msra.mxu0 %v69
    %101 = vmatprep.subr.mxu0 0.0
    %102 = vmatpush1.msra.mxu0 0.0
    %103 = vmatprep.subr.mxu0 0.0
    %104 = vmatpush1.msra.mxu0 0.0
    %105 = vmatprep.subr.mxu0 0.0
    %106 = vmatpush1.msra.mxu0 0.0
    %107 = vmatprep.subr.mxu0 0.0
    %108 = vmatpush1.msra.mxu0 0.0
    %109 = vmatprep.subr.mxu0 0.0
    %110 = vmatpush1.msra.mxu0 0.0
    %111 = vmatprep.subr.mxu0 0.0
    %112 = vmatpush1.msra.mxu0 0.0
    %113 = vmatprep.subr.mxu0 0.0
    %114 = vmatpush1.msra.mxu0 0.0
    %115 = vmatprep.subr.mxu0 0.0
    %116 = vmatpush1.msra.mxu0 0.0
    %117 = vmatprep.subr.mxu0 0.0
    %118 = vmatpush1.msra.mxu0 0.0
    %119 = vmatprep.subr.mxu0 0.0
    %120 = vmatpush1.msra.mxu0 0.0
    %121 = vmatprep.subr.mxu0 0.0
    %122 = vmatpush1.msra.mxu0 0.0
    %123 = vmatprep.subr.mxu0 0.0
    %124 = vmatpush1.msra.mxu0 0.0
    %125 = vmatprep.subr.mxu0 0.0
    %126 = vmatpush1.msra.mxu0 0.0
    %127 = vmatprep.subr.mxu0 0.0
    %128 = vmatpush1.msra.mxu0 0.0
    %129 = vmatprep.subr.mxu0 0.0
    %130 = vmatpush1.msra.mxu0 0.0
    %131 = vmatprep.subr.mxu0 0.0
    %132 = vmatpush1.msra.mxu0 0.0
    %133 = vmatprep.subr.mxu0 0.0
    %134 = vmatpush1.msra.mxu0 0.0
    %135 = vmatprep.subr.mxu0 0.0
    %136 = vmatpush1.msra.mxu0 0.0
    %137 = vmatprep.subr.mxu0 0.0
    %138 = vmatpush1.msra.mxu0 0.0
    %139 = vmatprep.subr.mxu0 0.0
    %140 = vmatpush1.msra.mxu0 0.0
    %141 = vmatprep.mubr.f32.mxu0 0.0
    %142 = vmatmul.mubr.f32.gmra.mrb[0].mxu0 %v72
    %v143 = vpop.f32.mrb[0].mxu0
    %v144 = vadd.f32 0.0, %v143
    %v145 = vpop.f32.mrb[0].mxu0
    %146 = vmatprep.mubr.f32.mxu0 0.0
    %147 = vmatmul.mubr.f32.gmra.mrb[0].mxu0 %v75
    %v148 = vpop.f32.mrb[0].mxu0
    %v149 = vadd.f32 0.0, %v148
    %v150 = vpop.f32.mrb[0].mxu0
    %151 = vdwg.mxu0
    %153 = vrot.lane.b32.xlu0 %v144, 120
    %v154 = vpop.permute.xlu0 %153
    %155 = vrot.lane.b32.xlu0 %v144, 112
    %v156 = vpop.permute.xlu0 %155
    %157 = vrot.lane.b32.xlu0 %v144, 104
    %v158 = vpop.permute.xlu0 %157
    %160 = vrot.lane.b32.xlu0 %v149, 120
    %v161 = vpop.permute.xlu0 %160
    %162 = vrot.lane.b32.xlu0 %v149, 112
    %v163 = vpop.permute.xlu0 %162
    %164 = vrot.lane.b32.xlu0 %v149, 104
    %v165 = vpop.permute.xlu0 %164
    %166 = vrot.lane.b32.xlu0 %v144, 96
    %v167 = vpop.permute.xlu0 %166
    %vm168 = vcmask 64512
    %v169 = vsel %vm168, %v144, 0
    %v171 = vsel %vm168, %v167, 0
    %173 = vmatprep.subr.mxu0 0.0
    %174 = vmatpush1.xpose.msra.mxu0 %v171
    %175 = vmatprep.subr.mxu0 0.0
    %176 = vmatpush1.xpose.msra.mxu0 0.0
    %177 = vmatprep.subr.mxu0 0.0
    %178 = vmatpush1.xpose.msra.mxu0 0.0
    %179 = vmatprep.subr.mxu0 0.0
    %180 = vmatpush1.xpose.msra.mxu0 0.0
    %181 = vmatprep.subr.mxu0 0.0
    %182 = vmatpush1.xpose.msra.mxu0 0.0
    %183 = vmatprep.subr.mxu0 0.0
    %184 = vmatpush1.xpose.msra.mxu0 0.0
    %185 = vmatprep.subr.mxu0 0.0
    %186 = vmatpush1.xpose.msra.mxu0 0.0
    %187 = vmatprep.subr.mxu0 0.0
    %188 = vmatpush1.xpose.msra.mxu0 0.0
    %189 = vmatprep.subr.mxu0 0.0
    %190 = vmatpush1.xpose.msra.mxu0 0.0
    %191 = vmatprep.subr.mxu0 0.0
    %192 = vmatpush1.xpose.msra.mxu0 0.0
    %193 = vmatprep.subr.mxu0 0.0
    %194 = vmatpush1.xpose.msra.mxu0 0.0
    %195 = vmatprep.subr.mxu0 0.0
    %196 = vmatpush1.xpose.msra.mxu0 0.0
    %197 = vmatprep.subr.mxu0 0.0
    %198 = vmatpush1.xpose.msra.mxu0 0.0
    %199 = vmatprep.subr.mxu0 0.0
    %200 = vmatpush1.xpose.msra.mxu0 0.0
    %201 = vmatprep.subr.mxu0 0.0
    %202 = vmatpush1.xpose.msra.mxu0 0.0
    %203 = vmatprep.subr.mxu0 0.0
    %204 = vmatpush1.xpose.msra.mxu0 0.0
    %205 = vmatprep.subr.mxu0 0.0
    %206 = vmatpush1.xpose.msra.mxu0 0.0
    %207 = vmatprep.subr.mxu0 0.0
    %208 = vmatpush1.xpose.msra.mxu0 0.0
    %209 = vmatprep.subr.mxu0 0.0
    %210 = vmatpush1.xpose.msra.mxu0 0.0
    %211 = vmatprep.subr.mxu0 0.0
    %212 = vmatpush1.xpose.msra.mxu0 0.0
    %213 = vmatprep.subr.mxu0 0.0
    %214 = vmatpush1.xpose.msra.mxu0 0.0
    %215 = vmatprep.subr.mxu0 0.0
    %216 = vmatpush1.xpose.msra.mxu0 0.0
    %217 = vmatprep.subr.mxu0 0.0
    %218 = vmatpush1.xpose.msra.mxu0 0.0
    %219 = vmatprep.subr.mxu0 0.0
    %220 = vmatpush1.xpose.msra.mxu0 0.0
    %221 = vmatprep.subr.mxu0 0.0
    %222 = vmatpush1.xpose.msra.mxu0 0.0
    %223 = vmatprep.subr.mxu0 0.0
    %224 = vmatpush1.xpose.msra.mxu0 0.0
    %225 = vmatprep.subr.mxu0 0.0
    %226 = vmatpush1.xpose.msra.mxu0 0.0
    %227 = vmatprep.subr.mxu0 0.0
    %228 = vmatpush1.xpose.msra.mxu0 0.0
    %229 = vmatprep.subr.mxu0 0.0
    %230 = vmatpush1.xpose.msra.mxu0 0.0
    %231 = vmatprep.subr.mxu0 0.0
    %232 = vmatpush1.xpose.msra.mxu0 0.0
    %233 = vmatprep.subr.mxu0 0.0
    %234 = vmatpush1.xpose.msra.mxu0 0.0
    %235 = vmatprep.subr.mxu0 0.0
    %236 = vmatpush1.xpose.msra.mxu0 0.0
    %237 = vmatprep.mubr.f32.mxu0 0.0
    %238 = vmatmul.mubr.f32.gmra.mrb[0].mxu0 %v169
    %v239 = vpop.f32.mrb[0].mxu0
    %v240 = vadd.f32 0.0, %v239
    %v241 = vpop.f32.mrb[0].mxu0
    %242 = vdwg.mxu0
    %243 = vrot.lane.b32.xlu0 %v154, 96
    %v244 = vpop.permute.xlu0 %243
    %v245 = vsel %vm168, %v154, 0
    %v247 = vsel %vm168, %v244, 0
    %249 = vmatprep.subr.mxu0 0.0
    %250 = vmatpush1.xpose.msra.mxu0 %v247
    %251 = vmatprep.subr.mxu0 0.0
    %252 = vmatpush1.xpose.msra.mxu0 0.0
    %253 = vmatprep.subr.mxu0 0.0
    %254 = vmatpush1.xpose.msra.mxu0 0.0
    %255 = vmatprep.subr.mxu0 0.0
    %256 = vmatpush1.xpose.msra.mxu0 0.0
    %257 = vmatprep.subr.mxu0 0.0
    %258 = vmatpush1.xpose.msra.mxu0 0.0
    %259 = vmatprep.subr.mxu0 0.0
    %260 = vmatpush1.xpose.msra.mxu0 0.0
    %261 = vmatprep.subr.mxu0 0.0
    %262 = vmatpush1.xpose.msra.mxu0 0.0
    %263 = vmatprep.subr.mxu0 0.0
    %264 = vmatpush1.xpose.msra.mxu0 0.0
    %265 = vmatprep.subr.mxu0 0.0
    %266 = vmatpush1.xpose.msra.mxu0 0.0
    %267 = vmatprep.subr.mxu0 0.0
    %268 = vmatpush1.xpose.msra.mxu0 0.0
    %269 = vmatprep.subr.mxu0 0.0
    %270 = vmatpush1.xpose.msra.mxu0 0.0
    %271 = vmatprep.subr.mxu0 0.0
    %272 = vmatpush1.xpose.msra.mxu0 0.0
    %273 = vmatprep.subr.mxu0 0.0
    %274 = vmatpush1.xpose.msra.mxu0 0.0
    %275 = vmatprep.subr.mxu0 0.0
    %276 = vmatpush1.xpose.msra.mxu0 0.0
    %277 = vmatprep.subr.mxu0 0.0
    %278 = vmatpush1.xpose.msra.mxu0 0.0
    %279 = vmatprep.subr.mxu0 0.0
    %280 = vmatpush1.xpose.msra.mxu0 0.0
    %281 = vmatprep.subr.mxu0 0.0
    %282 = vmatpush1.xpose.msra.mxu0 0.0
    %283 = vmatprep.subr.mxu0 0.0
    %284 = vmatpush1.xpose.msra.mxu0 0.0
    %285 = vmatprep.subr.mxu0 0.0
    %286 = vmatpush1.xpose.msra.mxu0 0.0
    %287 = vmatprep.subr.mxu0 0.0
    %288 = vmatpush1.xpose.msra.mxu0 0.0
    %289 = vmatprep.subr.mxu0 0.0
    %290 = vmatpush1.xpose.msra.mxu0 0.0
    %291 = vmatprep.subr.mxu0 0.0
    %292 = vmatpush1.xpose.msra.mxu0 0.0
    %293 = vmatprep.subr.mxu0 0.0
    %294 = vmatpush1.xpose.msra.mxu0 0.0
    %295 = vmatprep.subr.mxu0 0.0
    %296 = vmatpush1.xpose.msra.mxu0 0.0
    %297 = vmatprep.subr.mxu0 0.0
    %298 = vmatpush1.xpose.msra.mxu0 0.0
    %299 = vmatprep.subr.mxu0 0.0
    %300 = vmatpush1.xpose.msra.mxu0 0.0
    %301 = vmatprep.subr.mxu0 0.0
    %302 = vmatpush1.xpose.msra.mxu0 0.0
    %303 = vmatprep.subr.mxu0 0.0
    %304 = vmatpush1.xpose.msra.mxu0 0.0
    %305 = vmatprep.subr.mxu0 0.0
    %306 = vmatpush1.xpose.msra.mxu0 0.0
    %307 = vmatprep.subr.mxu0 0.0
    %308 = vmatpush1.xpose.msra.mxu0 0.0
    %309 = vmatprep.subr.mxu0 0.0
    %310 = vmatpush1.xpose.msra.mxu0 0.0
    %311 = vmatprep.subr.mxu0 0.0
    %312 = vmatpush1.xpose.msra.mxu0 0.0
    %313 = vmatprep.mubr.f32.mxu0 0.0
    %314 = vmatmul.mubr.f32.gmra.mrb[0].mxu0 %v245
    %v315 = vpop.f32.mrb[0].mxu0
    %v316 = vadd.f32 0.0, %v315
    %v317 = vpop.f32.mrb[0].mxu0
    %318 = vdwg.mxu0
    %319 = vrot.lane.b32.xlu0 %v156, 96
    %v320 = vpop.permute.xlu0 %319
    %v321 = vsel %vm168, %v156, 0
    %v323 = vsel %vm168, %v320, 0
    %325 = vmatprep.subr.mxu0 0.0
    %326 = vmatpush1.xpose.msra.mxu0 %v323
    %327 = vmatprep.subr.mxu0 0.0
    %328 = vmatpush1.xpose.msra.mxu0 0.0
    %329 = vmatprep.subr.mxu0 0.0
    %330 = vmatpush1.xpose.msra.mxu0 0.0
    %331 = vmatprep.subr.mxu0 0.0
    %332 = vmatpush1.xpose.msra.mxu0 0.0
    %333 = vmatprep.subr.mxu0 0.0
    %334 = vmatpush1.xpose.msra.mxu0 0.0
    %335 = vmatprep.subr.mxu0 0.0
    %336 = vmatpush1.xpose.msra.mxu0 0.0
    %337 = vmatprep.subr.mxu0 0.0
    %338 = vmatpush1.xpose.msra.mxu0 0.0
    %339 = vmatprep.subr.mxu0 0.0
    %340 = vmatpush1.xpose.msra.mxu0 0.0
    %341 = vmatprep.subr.mxu0 0.0
    %342 = vmatpush1.xpose.msra.mxu0 0.0
    %343 = vmatprep.subr.mxu0 0.0
    %344 = vmatpush1.xpose.msra.mxu0 0.0
    %345 = vmatprep.subr.mxu0 0.0
    %346 = vmatpush1.xpose.msra.mxu0 0.0
    %347 = vmatprep.subr.mxu0 0.0
    %348 = vmatpush1.xpose.msra.mxu0 0.0
    %349 = vmatprep.subr.mxu0 0.0
    %350 = vmatpush1.xpose.msra.mxu0 0.0
    %351 = vmatprep.subr.mxu0 0.0
    %352 = vmatpush1.xpose.msra.mxu0 0.0
    %353 = vmatprep.subr.mxu0 0.0
    %354 = vmatpush1.xpose.msra.mxu0 0.0
    %355 = vmatprep.subr.mxu0 0.0
    %356 = vmatpush1.xpose.msra.mxu0 0.0
    %357 = vmatprep.subr.mxu0 0.0
    %358 = vmatpush1.xpose.msra.mxu0 0.0
    %359 = vmatprep.subr.mxu0 0.0
    %360 = vmatpush1.xpose.msra.mxu0 0.0
    %361 = vmatprep.subr.mxu0 0.0
    %362 = vmatpush1.xpose.msra.mxu0 0.0
    %363 = vmatprep.subr.mxu0 0.0
    %364 = vmatpush1.xpose.msra.mxu0 0.0
    %365 = vmatprep.subr.mxu0 0.0
    %366 = vmatpush1.xpose.msra.mxu0 0.0
    %367 = vmatprep.subr.mxu0 0.0
    %368 = vmatpush1.xpose.msra.mxu0 0.0
    %369 = vmatprep.subr.mxu0 0.0
    %370 = vmatpush1.xpose.msra.mxu0 0.0
    %371 = vmatprep.subr.mxu0 0.0
    %372 = vmatpush1.xpose.msra.mxu0 0.0
    %373 = vmatprep.subr.mxu0 0.0
    %374 = vmatpush1.xpose.msra.mxu0 0.0
    %375 = vmatprep.subr.mxu0 0.0
    %376 = vmatpush1.xpose.msra.mxu0 0.0
    %377 = vmatprep.subr.mxu0 0.0
    %378 = vmatpush1.xpose.msra.mxu0 0.0
    %379 = vmatprep.subr.mxu0 0.0
    %380 = vmatpush1.xpose.msra.mxu0 0.0
    %381 = vmatprep.subr.mxu0 0.0
    %382 = vmatpush1.xpose.msra.mxu0 0.0
    %383 = vmatprep.subr.mxu0 0.0
    %384 = vmatpush1.xpose.msra.mxu0 0.0
    %385 = vmatprep.subr.mxu0 0.0
    %386 = vmatpush1.xpose.msra.mxu0 0.0
    %387 = vmatprep.subr.mxu0 0.0
    %388 = vmatpush1.xpose.msra.mxu0 0.0
    %389 = vmatprep.mubr.f32.mxu0 0.0
    %390 = vmatmul.mubr.f32.gmra.mrb[0].mxu0 %v321
    %v391 = vpop.f32.mrb[0].mxu0
    %v392 = vadd.f32 0.0, %v391
    %v393 = vpop.f32.mrb[0].mxu0
    %394 = vdwg.mxu0
    %395 = vrot.lane.b32.xlu0 %v158, 96
    %v396 = vpop.permute.xlu0 %395
    %v397 = vsel %vm168, %v158, 0
    %v399 = vsel %vm168, %v396, 0
    %401 = vmatprep.subr.mxu0 0.0
    %402 = vmatpush1.xpose.msra.mxu0 %v399
    %403 = vmatprep.subr.mxu0 0.0
    %404 = vmatpush1.xpose.msra.mxu0 0.0
    %405 = vmatprep.subr.mxu0 0.0
    %406 = vmatpush1.xpose.msra.mxu0 0.0
    %407 = vmatprep.subr.mxu0 0.0
    %408 = vmatpush1.xpose.msra.mxu0 0.0
    %409 = vmatprep.subr.mxu0 0.0
    %410 = vmatpush1.xpose.msra.mxu0 0.0
    %411 = vmatprep.subr.mxu0 0.0
    %412 = vmatpush1.xpose.msra.mxu0 0.0
    %413 = vmatprep.subr.mxu0 0.0
    %414 = vmatpush1.xpose.msra.mxu0 0.0
    %415 = vmatprep.subr.mxu0 0.0
    %416 = vmatpush1.xpose.msra.mxu0 0.0
    %417 = vmatprep.subr.mxu0 0.0
    %418 = vmatpush1.xpose.msra.mxu0 0.0
    %419 = vmatprep.subr.mxu0 0.0
    %420 = vmatpush1.xpose.msra.mxu0 0.0
    %421 = vmatprep.subr.mxu0 0.0
    %422 = vmatpush1.xpose.msra.mxu0 0.0
    %423 = vmatprep.subr.mxu0 0.0
    %424 = vmatpush1.xpose.msra.mxu0 0.0
    %425 = vmatprep.subr.mxu0 0.0
    %426 = vmatpush1.xpose.msra.mxu0 0.0
    %427 = vmatprep.subr.mxu0 0.0
    %428 = vmatpush1.xpose.msra.mxu0 0.0
    %429 = vmatprep.subr.mxu0 0.0
    %430 = vmatpush1.xpose.msra.mxu0 0.0
    %431 = vmatprep.subr.mxu0 0.0
    %432 = vmatpush1.xpose.msra.mxu0 0.0
    %433 = vmatprep.subr.mxu0 0.0
    %434 = vmatpush1.xpose.msra.mxu0 0.0
    %435 = vmatprep.subr.mxu0 0.0
    %436 = vmatpush1.xpose.msra.mxu0 0.0
    %437 = vmatprep.subr.mxu0 0.0
    %438 = vmatpush1.xpose.msra.mxu0 0.0
    %439 = vmatprep.subr.mxu0 0.0
    %440 = vmatpush1.xpose.msra.mxu0 0.0
    %441 = vmatprep.subr.mxu0 0.0
    %442 = vmatpush1.xpose.msra.mxu0 0.0
    %443 = vmatprep.subr.mxu0 0.0
    %444 = vmatpush1.xpose.msra.mxu0 0.0
    %445 = vmatprep.subr.mxu0 0.0
    %446 = vmatpush1.xpose.msra.mxu0 0.0
    %447 = vmatprep.subr.mxu0 0.0
    %448 = vmatpush1.xpose.msra.mxu0 0.0
    %449 = vmatprep.subr.mxu0 0.0
    %450 = vmatpush1.xpose.msra.mxu0 0.0
    %451 = vmatprep.subr.mxu0 0.0
    %452 = vmatpush1.xpose.msra.mxu0 0.0
    %453 = vmatprep.subr.mxu0 0.0
    %454 = vmatpush1.xpose.msra.mxu0 0.0
    %455 = vmatprep.subr.mxu0 0.0
    %456 = vmatpush1.xpose.msra.mxu0 0.0
    %457 = vmatprep.subr.mxu0 0.0
    %458 = vmatpush1.xpose.msra.mxu0 0.0
    %459 = vmatprep.subr.mxu0 0.0
    %460 = vmatpush1.xpose.msra.mxu0 0.0
    %461 = vmatprep.subr.mxu0 0.0
    %462 = vmatpush1.xpose.msra.mxu0 0.0
    %463 = vmatprep.subr.mxu0 0.0
    %464 = vmatpush1.xpose.msra.mxu0 0.0
    %465 = vmatprep.mubr.f32.mxu0 0.0
    %466 = vmatmul.mubr.f32.gmra.mrb[0].mxu0 %v397
    %v467 = vpop.f32.mrb[0].mxu0
    %v468 = vadd.f32 0.0, %v467
    %v469 = vpop.f32.mrb[0].mxu0
    %470 = vdwg.mxu0
    %471 = vrot.lane.b32.xlu0 %v149, 96
    %v472 = vpop.permute.xlu0 %471
    %v473 = vsel %vm168, %v149, 0
    %v475 = vsel %vm168, %v472, 0
    %477 = vmatprep.subr.mxu0 0.0
    %478 = vmatpush1.xpose.msra.mxu0 %v475
    %479 = vmatprep.subr.mxu0 0.0
    %480 = vmatpush1.xpose.msra.mxu0 0.0
    %481 = vmatprep.subr.mxu0 0.0
    %482 = vmatpush1.xpose.msra.mxu0 0.0
    %483 = vmatprep.subr.mxu0 0.0
    %484 = vmatpush1.xpose.msra.mxu0 0.0
    %485 = vmatprep.subr.mxu0 0.0
    %486 = vmatpush1.xpose.msra.mxu0 0.0
    %487 = vmatprep.subr.mxu0 0.0
    %488 = vmatpush1.xpose.msra.mxu0 0.0
    %489 = vmatprep.subr.mxu0 0.0
    %490 = vmatpush1.xpose.msra.mxu0 0.0
    %491 = vmatprep.subr.mxu0 0.0
    %492 = vmatpush1.xpose.msra.mxu0 0.0
    %493 = vmatprep.subr.mxu0 0.0
    %494 = vmatpush1.xpose.msra.mxu0 0.0
    %495 = vmatprep.subr.mxu0 0.0
    %496 = vmatpush1.xpose.msra.mxu0 0.0
    %497 = vmatprep.subr.mxu0 0.0
    %498 = vmatpush1.xpose.msra.mxu0 0.0
    %499 = vmatprep.subr.mxu0 0.0
    %500 = vmatpush1.xpose.msra.mxu0 0.0
    %501 = vmatprep.subr.mxu0 0.0
    %502 = vmatpush1.xpose.msra.mxu0 0.0
    %503 = vmatprep.subr.mxu0 0.0
    %504 = vmatpush1.xpose.msra.mxu0 0.0
    %505 = vmatprep.subr.mxu0 0.0
    %506 = vmatpush1.xpose.msra.mxu0 0.0
    %507 = vmatprep.subr.mxu0 0.0
    %508 = vmatpush1.xpose.msra.mxu0 0.0
    %509 = vmatprep.subr.mxu0 0.0
    %510 = vmatpush1.xpose.msra.mxu0 0.0
    %511 = vmatprep.subr.mxu0 0.0
    %512 = vmatpush1.xpose.msra.mxu0 0.0
    %513 = vmatprep.subr.mxu0 0.0
    %514 = vmatpush1.xpose.msra.mxu0 0.0
    %515 = vmatprep.subr.mxu0 0.0
    %516 = vmatpush1.xpose.msra.mxu0 0.0
    %517 = vmatprep.subr.mxu0 0.0
    %518 = vmatpush1.xpose.msra.mxu0 0.0
    %519 = vmatprep.subr.mxu0 0.0
    %520 = vmatpush1.xpose.msra.mxu0 0.0
    %521 = vmatprep.subr.mxu0 0.0
    %522 = vmatpush1.xpose.msra.mxu0 0.0
    %523 = vmatprep.subr.mxu0 0.0
    %524 = vmatpush1.xpose.msra.mxu0 0.0
    %525 = vmatprep.subr.mxu0 0.0
    %526 = vmatpush1.xpose.msra.mxu0 0.0
    %527 = vmatprep.subr.mxu0 0.0
    %528 = vmatpush1.xpose.msra.mxu0 0.0
    %529 = vmatprep.subr.mxu0 0.0
    %530 = vmatpush1.xpose.msra.mxu0 0.0
    %531 = vmatprep.subr.mxu0 0.0
    %532 = vmatpush1.xpose.msra.mxu0 0.0
    %533 = vmatprep.subr.mxu0 0.0
    %534 = vmatpush1.xpose.msra.mxu0 0.0
    %535 = vmatprep.subr.mxu0 0.0
    %536 = vmatpush1.xpose.msra.mxu0 0.0
    %537 = vmatprep.subr.mxu0 0.0
    %538 = vmatpush1.xpose.msra.mxu0 0.0
    %539 = vmatprep.subr.mxu0 0.0
    %540 = vmatpush1.xpose.msra.mxu0 0.0
    %541 = vmatprep.mubr.f32.mxu0 0.0
    %542 = vmatmul.mubr.f32.gmra.mrb[0].mxu0 %v473
    %v543 = vpop.f32.mrb[0].mxu0
    %v544 = vadd.f32 0.0, %v543
    %v545 = vpop.f32.mrb[0].mxu0
    %546 = vdwg.mxu0
    %547 = vrot.lane.b32.xlu0 %v161, 96
    %v548 = vpop.permute.xlu0 %547
    %v549 = vsel %vm168, %v161, 0
    %v551 = vsel %vm168, %v548, 0
    %553 = vmatprep.subr.mxu0 0.0
    %554 = vmatpush1.xpose.msra.mxu0 %v551
    %555 = vmatprep.subr.mxu0 0.0
    %556 = vmatpush1.xpose.msra.mxu0 0.0
    %557 = vmatprep.subr.mxu0 0.0
    %558 = vmatpush1.xpose.msra.mxu0 0.0
    %559 = vmatprep.subr.mxu0 0.0
    %560 = vmatpush1.xpose.msra.mxu0 0.0
    %561 = vmatprep.subr.mxu0 0.0
    %562 = vmatpush1.xpose.msra.mxu0 0.0
    %563 = vmatprep.subr.mxu0 0.0
    %564 = vmatpush1.xpose.msra.mxu0 0.0
    %565 = vmatprep.subr.mxu0 0.0
    %566 = vmatpush1.xpose.msra.mxu0 0.0
    %567 = vmatprep.subr.mxu0 0.0
    %568 = vmatpush1.xpose.msra.mxu0 0.0
    %569 = vmatprep.subr.mxu0 0.0
    %570 = vmatpush1.xpose.msra.mxu0 0.0
    %571 = vmatprep.subr.mxu0 0.0
    %572 = vmatpush1.xpose.msra.mxu0 0.0
    %573 = vmatprep.subr.mxu0 0.0
    %574 = vmatpush1.xpose.msra.mxu0 0.0
    %575 = vmatprep.subr.mxu0 0.0
    %576 = vmatpush1.xpose.msra.mxu0 0.0
    %577 = vmatprep.subr.mxu0 0.0
    %578 = vmatpush1.xpose.msra.mxu0 0.0
    %579 = vmatprep.subr.mxu0 0.0
    %580 = vmatpush1.xpose.msra.mxu0 0.0
    %581 = vmatprep.subr.mxu0 0.0
    %582 = vmatpush1.xpose.msra.mxu0 0.0
    %583 = vmatprep.subr.mxu0 0.0
    %584 = vmatpush1.xpose.msra.mxu0 0.0
    %585 = vmatprep.subr.mxu0 0.0
    %586 = vmatpush1.xpose.msra.mxu0 0.0
    %587 = vmatprep.subr.mxu0 0.0
    %588 = vmatpush1.xpose.msra.mxu0 0.0
    %589 = vmatprep.subr.mxu0 0.0
    %590 = vmatpush1.xpose.msra.mxu0 0.0
    %591 = vmatprep.subr.mxu0 0.0
    %592 = vmatpush1.xpose.msra.mxu0 0.0
    %593 = vmatprep.subr.mxu0 0.0
    %594 = vmatpush1.xpose.msra.mxu0 0.0
    %595 = vmatprep.subr.mxu0 0.0
    %596 = vmatpush1.xpose.msra.mxu0 0.0
    %597 = vmatprep.subr.mxu0 0.0
    %598 = vmatpush1.xpose.msra.mxu0 0.0
    %599 = vmatprep.subr.mxu0 0.0
    %600 = vmatpush1.xpose.msra.mxu0 0.0
    %601 = vmatprep.subr.mxu0 0.0
    %602 = vmatpush1.xpose.msra.mxu0 0.0
    %603 = vmatprep.subr.mxu0 0.0
    %604 = vmatpush1.xpose.msra.mxu0 0.0
    %605 = vmatprep.subr.mxu0 0.0
    %606 = vmatpush1.xpose.msra.mxu0 0.0
    %607 = vmatprep.subr.mxu0 0.0
    %608 = vmatpush1.xpose.msra.mxu0 0.0
    %609 = vmatprep.subr.mxu0 0.0
    %610 = vmatpush1.xpose.msra.mxu0 0.0
    %611 = vmatprep.subr.mxu0 0.0
    %612 = vmatpush1.xpose.msra.mxu0 0.0
    %613 = vmatprep.subr.mxu0 0.0
    %614 = vmatpush1.xpose.msra.mxu0 0.0
    %615 = vmatprep.subr.mxu0 0.0
    %616 = vmatpush1.xpose.msra.mxu0 0.0
    %617 = vmatprep.mubr.f32.mxu0 0.0
    %618 = vmatmul.mubr.f32.gmra.mrb[0].mxu0 %v549
    %v619 = vpop.f32.mrb[0].mxu0
    %v620 = vadd.f32 0.0, %v619
    %v621 = vpop.f32.mrb[0].mxu0
    %622 = vdwg.mxu0
    %623 = vrot.lane.b32.xlu0 %v163, 96
    %v624 = vpop.permute.xlu0 %623
    %v625 = vsel %vm168, %v163, 0
    %v627 = vsel %vm168, %v624, 0
    %629 = vmatprep.subr.mxu0 0.0
    %630 = vmatpush1.xpose.msra.mxu0 %v627
    %631 = vmatprep.subr.mxu0 0.0
    %632 = vmatpush1.xpose.msra.mxu0 0.0
    %633 = vmatprep.subr.mxu0 0.0
    %634 = vmatpush1.xpose.msra.mxu0 0.0
    %635 = vmatprep.subr.mxu0 0.0
    %636 = vmatpush1.xpose.msra.mxu0 0.0
    %637 = vmatprep.subr.mxu0 0.0
    %638 = vmatpush1.xpose.msra.mxu0 0.0
    %639 = vmatprep.subr.mxu0 0.0
    %640 = vmatpush1.xpose.msra.mxu0 0.0
    %641 = vmatprep.subr.mxu0 0.0
    %642 = vmatpush1.xpose.msra.mxu0 0.0
    %643 = vmatprep.subr.mxu0 0.0
    %644 = vmatpush1.xpose.msra.mxu0 0.0
    %645 = vmatprep.subr.mxu0 0.0
    %646 = vmatpush1.xpose.msra.mxu0 0.0
    %647 = vmatprep.subr.mxu0 0.0
    %648 = vmatpush1.xpose.msra.mxu0 0.0
    %649 = vmatprep.subr.mxu0 0.0
    %650 = vmatpush1.xpose.msra.mxu0 0.0
    %651 = vmatprep.subr.mxu0 0.0
    %652 = vmatpush1.xpose.msra.mxu0 0.0
    %653 = vmatprep.subr.mxu0 0.0
    %654 = vmatpush1.xpose.msra.mxu0 0.0
    %655 = vmatprep.subr.mxu0 0.0
    %656 = vmatpush1.xpose.msra.mxu0 0.0
    %657 = vmatprep.subr.mxu0 0.0
    %658 = vmatpush1.xpose.msra.mxu0 0.0
    %659 = vmatprep.subr.mxu0 0.0
    %660 = vmatpush1.xpose.msra.mxu0 0.0
    %661 = vmatprep.subr.mxu0 0.0
    %662 = vmatpush1.xpose.msra.mxu0 0.0
    %663 = vmatprep.subr.mxu0 0.0
    %664 = vmatpush1.xpose.msra.mxu0 0.0
    %665 = vmatprep.subr.mxu0 0.0
    %666 = vmatpush1.xpose.msra.mxu0 0.0
    %667 = vmatprep.subr.mxu0 0.0
    %668 = vmatpush1.xpose.msra.mxu0 0.0
    %669 = vmatprep.subr.mxu0 0.0
    %670 = vmatpush1.xpose.msra.mxu0 0.0
    %671 = vmatprep.subr.mxu0 0.0
    %672 = vmatpush1.xpose.msra.mxu0 0.0
    %673 = vmatprep.subr.mxu0 0.0
    %674 = vmatpush1.xpose.msra.mxu0 0.0
    %675 = vmatprep.subr.mxu0 0.0
    %676 = vmatpush1.xpose.msra.mxu0 0.0
    %677 = vmatprep.subr.mxu0 0.0
    %678 = vmatpush1.xpose.msra.mxu0 0.0
    %679 = vmatprep.subr.mxu0 0.0
    %680 = vmatpush1.xpose.msra.mxu0 0.0
    %681 = vmatprep.subr.mxu0 0.0
    %682 = vmatpush1.xpose.msra.mxu0 0.0
    %683 = vmatprep.subr.mxu0 0.0
    %684 = vmatpush1.xpose.msra.mxu0 0.0
    %685 = vmatprep.subr.mxu0 0.0
    %686 = vmatpush1.xpose.msra.mxu0 0.0
    %687 = vmatprep.subr.mxu0 0.0
    %688 = vmatpush1.xpose.msra.mxu0 0.0
    %689 = vmatprep.subr.mxu0 0.0
    %690 = vmatpush1.xpose.msra.mxu0 0.0
    %691 = vmatprep.subr.mxu0 0.0
    %692 = vmatpush1.xpose.msra.mxu0 0.0
    %693 = vmatprep.mubr.f32.mxu0 0.0
    %694 = vmatmul.mubr.f32.gmra.mrb[0].mxu0 %v625
    %v695 = vpop.f32.mrb[0].mxu0
    %v696 = vadd.f32 0.0, %v695
    %v697 = vpop.f32.mrb[0].mxu0
    %698 = vdwg.mxu0
    %699 = vrot.lane.b32.xlu0 %v165, 96
    %v700 = vpop.permute.xlu0 %699
    %v701 = vsel %vm168, %v165, 0
    %v703 = vsel %vm168, %v700, 0
    %705 = vmatprep.subr.mxu0 0.0
    %706 = vmatpush1.xpose.msra.mxu0 %v703
    %707 = vmatprep.subr.mxu0 0.0
    %708 = vmatpush1.xpose.msra.mxu0 0.0
    %709 = vmatprep.subr.mxu0 0.0
    %710 = vmatpush1.xpose.msra.mxu0 0.0
    %711 = vmatprep.subr.mxu0 0.0
    %712 = vmatpush1.xpose.msra.mxu0 0.0
    %713 = vmatprep.subr.mxu0 0.0
    %714 = vmatpush1.xpose.msra.mxu0 0.0
    %715 = vmatprep.subr.mxu0 0.0
    %716 = vmatpush1.xpose.msra.mxu0 0.0
    %717 = vmatprep.subr.mxu0 0.0
    %718 = vmatpush1.xpose.msra.mxu0 0.0
    %719 = vmatprep.subr.mxu0 0.0
    %720 = vmatpush1.xpose.msra.mxu0 0.0
    %721 = vmatprep.subr.mxu0 0.0
    %722 = vmatpush1.xpose.msra.mxu0 0.0
    %723 = vmatprep.subr.mxu0 0.0
    %724 = vmatpush1.xpose.msra.mxu0 0.0
    %725 = vmatprep.subr.mxu0 0.0
    %726 = vmatpush1.xpose.msra.mxu0 0.0
    %727 = vmatprep.subr.mxu0 0.0
    %728 = vmatpush1.xpose.msra.mxu0 0.0
    %729 = vmatprep.subr.mxu0 0.0
    %730 = vmatpush1.xpose.msra.mxu0 0.0
    %731 = vmatprep.subr.mxu0 0.0
    %732 = vmatpush1.xpose.msra.mxu0 0.0
    %733 = vmatprep.subr.mxu0 0.0
    %734 = vmatpush1.xpose.msra.mxu0 0.0
    %735 = vmatprep.subr.mxu0 0.0
    %736 = vmatpush1.xpose.msra.mxu0 0.0
    %737 = vmatprep.subr.mxu0 0.0
    %738 = vmatpush1.xpose.msra.mxu0 0.0
    %739 = vmatprep.subr.mxu0 0.0
    %740 = vmatpush1.xpose.msra.mxu0 0.0
    %741 = vmatprep.subr.mxu0 0.0
    %742 = vmatpush1.xpose.msra.mxu0 0.0
    %743 = vmatprep.subr.mxu0 0.0
    %744 = vmatpush1.xpose.msra.mxu0 0.0
    %745 = vmatprep.subr.mxu0 0.0
    %746 = vmatpush1.xpose.msra.mxu0 0.0
    %747 = vmatprep.subr.mxu0 0.0
    %748 = vmatpush1.xpose.msra.mxu0 0.0
    %749 = vmatprep.subr.mxu0 0.0
    %750 = vmatpush1.xpose.msra.mxu0 0.0
    %751 = vmatprep.subr.mxu0 0.0
    %752 = vmatpush1.xpose.msra.mxu0 0.0
    %753 = vmatprep.subr.mxu0 0.0
    %754 = vmatpush1.xpose.msra.mxu0 0.0
    %755 = vmatprep.subr.mxu0 0.0
    %756 = vmatpush1.xpose.msra.mxu0 0.0
    %757 = vmatprep.subr.mxu0 0.0
    %758 = vmatpush1.xpose.msra.mxu0 0.0
    %759 = vmatprep.subr.mxu0 0.0
    %760 = vmatpush1.xpose.msra.mxu0 0.0
    %761 = vmatprep.subr.mxu0 0.0
    %762 = vmatpush1.xpose.msra.mxu0 0.0
    %763 = vmatprep.subr.mxu0 0.0
    %764 = vmatpush1.xpose.msra.mxu0 0.0
    %765 = vmatprep.subr.mxu0 0.0
    %766 = vmatpush1.xpose.msra.mxu0 0.0
    %767 = vmatprep.subr.mxu0 0.0
    %768 = vmatpush1.xpose.msra.mxu0 0.0
    %769 = vmatprep.mubr.f32.mxu0 0.0
    %770 = vmatmul.mubr.f32.gmra.mrb[0].mxu0 %v701
    %v771 = vpop.f32.mrb[0].mxu0
    %v772 = vadd.f32 0.0, %v771
    %v773 = vpop.f32.mrb[0].mxu0
    %774 = vdwg.mxu0
    %v775 = vmul.f32 %v240, 0.35355338
    %v776 = vmul.f32 %v316, 0.35355338
    %v777 = vmul.f32 %v392, 0.35355338
    %v778 = vmul.f32 %v468, 0.35355338
    %v779 = vmul.f32 %v544, 0.35355338
    %v780 = vmul.f32 %v620, 0.35355338
    %v781 = vmul.f32 %v696, 0.35355338
    %v782 = vmul.f32 %v772, 0.35355338
    %v783 = vsel %vm168, %v775, -inf
    %784 = vmax.xlane.f32.xlu0 %v783
    %v785 = vpop.xlane.xlu0 %784
    %v786 = vsel %vm168, %v776, -inf
    %787 = vmax.xlane.f32.xlu0 %v786
    %v788 = vpop.xlane.xlu0 %787
    %v789 = vsel %vm168, %v777, -inf
    %790 = vmax.xlane.f32.xlu0 %v789
    %v791 = vpop.xlane.xlu0 %790
    %v792 = vsel %vm168, %v778, -inf
    %793 = vmax.xlane.f32.xlu0 %v792
    %v794 = vpop.xlane.xlu0 %793
    %v795 = vsel %vm168, %v779, -inf
    %796 = vmax.xlane.f32.xlu0 %v795
    %v797 = vpop.xlane.xlu0 %796
    %v798 = vsel %vm168, %v780, -inf
    %799 = vmax.xlane.f32.xlu0 %v798
    %v800 = vpop.xlane.xlu0 %799
    %v801 = vsel %vm168, %v781, -inf
    %802 = vmax.xlane.f32.xlu0 %v801
    %v803 = vpop.xlane.xlu0 %802
    %v804 = vsel %vm168, %v782, -inf
    %805 = vmax.xlane.f32.xlu0 %v804
    %v806 = vpop.xlane.xlu0 %805
    %v807 = vsub.f32 %v775, %v785
    %v808 = vsub.f32 %v776, %v788
    %v809 = vsub.f32 %v777, %v791
    %v810 = vsub.f32 %v778, %v794
    %v811 = vsub.f32 %v779, %v797
    %v812 = vsub.f32 %v780, %v800
    %v813 = vsub.f32 %v781, %v803
    %v814 = vsub.f32 %v782, %v806
    %v815 = vmul.f32 %v807, 1.442695
    %v816 = vpow.pop %v815
    %v817 = vmul.f32 %v808, 1.442695
    %v818 = vpow.pop %v817
    %v819 = vmul.f32 %v809, 1.442695
    %v820 = vpow.pop %v819
    %v821 = vmul.f32 %v810, 1.442695
    %v822 = vpow.pop %v821
    %v823 = vmul.f32 %v811, 1.442695
    %v824 = vpow.pop %v823
    %v825 = vmul.f32 %v812, 1.442695
    %v826 = vpow.pop %v825
    %v827 = vmul.f32 %v813, 1.442695
    %v828 = vpow.pop %v827
    %v829 = vmul.f32 %v814, 1.442695
    %v830 = vpow.pop %v829
    %v831 = vsel %vm168, %v816, 0.0
    %832 = vadd.xlane.f32.xlu0 %v831
    %v833 = vpop.xlane.xlu0 %832
    %v834 = vsel %vm168, %v818, 0.0
    %835 = vadd.xlane.f32.xlu0 %v834
    %v836 = vpop.xlane.xlu0 %835
    %v837 = vsel %vm168, %v820, 0.0
    %838 = vadd.xlane.f32.xlu0 %v837
    %v839 = vpop.xlane.xlu0 %838
    %v840 = vsel %vm168, %v822, 0.0
    %841 = vadd.xlane.f32.xlu0 %v840
    %v842 = vpop.xlane.xlu0 %841
    %v843 = vsel %vm168, %v824, 0.0
    %844 = vadd.xlane.f32.xlu0 %v843
    %v845 = vpop.xlane.xlu0 %844
    %v846 = vsel %vm168, %v826, 0.0
    %847 = vadd.xlane.f32.xlu0 %v846
    %v848 = vpop.xlane.xlu0 %847
    %v849 = vsel %vm168, %v828, 0.0
    %850 = vadd.xlane.f32.xlu0 %v849
    %v851 = vpop.xlane.xlu0 %850
    %v852 = vsel %vm168, %v830, 0.0
    %853 = vadd.xlane.f32.xlu0 %v852
    %v854 = vpop.xlane.xlu0 %853
    %v855 = vrcp.pop %v833
    %v856 = vrcp.pop %v836
    %v857 = vrcp.pop %v839
    %v858 = vrcp.pop %v842
    %v859 = vrcp.pop %v845
    %v860 = vrcp.pop %v848
    %v861 = vrcp.pop %v851
    %v862 = vrcp.pop %v854
    %v863 = vmul.f32 %v816, %v855
    %v864 = vmul.f32 %v818, %v856
    %v865 = vmul.f32 %v820, %v857
    %v866 = vmul.f32 %v822, %v858
    %v867 = vmul.f32 %v824, %v859
    %v868 = vmul.f32 %v826, %v860
    %v869 = vmul.f32 %v828, %v861
    %v870 = vmul.f32 %v830, %v862
    %871 = vrot.lane.b32.xlu0 %v144, 64
    %v872 = vpop.permute.xlu0 %871
    %v875 = vsel %vm168, %v863, 0
    %877 = vmatprep.subr.mxu0 0.0
    %878 = vmatpush1.msra.mxu0 %v872
    %879 = vmatprep.subr.mxu0 0.0
    %880 = vmatpush1.msra.mxu0 0.0
    %881 = vmatprep.subr.mxu0 0.0
    %882 = vmatpush1.msra.mxu0 0.0
    %883 = vmatprep.subr.mxu0 0.0
    %884 = vmatpush1.msra.mxu0 0.0
    %885 = vmatprep.subr.mxu0 0.0
    %886 = vmatpush1.msra.mxu0 0.0
    %887 = vmatprep.subr.mxu0 0.0
    %888 = vmatpush1.msra.mxu0 0.0
    %889 = vmatprep.subr.mxu0 0.0
    %890 = vmatpush1.msra.mxu0 0.0
    %891 = vmatprep.subr.mxu0 0.0
    %892 = vmatpush1.msra.mxu0 0.0
    %893 = vmatprep.subr.mxu0 0.0
    %894 = vmatpush1.msra.mxu0 0.0
    %895 = vmatprep.subr.mxu0 0.0
    %896 = vmatpush1.msra.mxu0 0.0
    %897 = vmatprep.subr.mxu0 0.0
    %898 = vmatpush1.msra.mxu0 0.0
    %899 = vmatprep.subr.mxu0 0.0
    %900 = vmatpush1.msra.mxu0 0.0
    %901 = vmatprep.subr.mxu0 0.0
    %902 = vmatpush1.msra.mxu0 0.0
    %903 = vmatprep.subr.mxu0 0.0
    %904 = vmatpush1.msra.mxu0 0.0
    %905 = vmatprep.subr.mxu0 0.0
    %906 = vmatpush1.msra.mxu0 0.0
    %907 = vmatprep.subr.mxu0 0.0
    %908 = vmatpush1.msra.mxu0 0.0
    %909 = vmatprep.subr.mxu0 0.0
    %910 = vmatpush1.msra.mxu0 0.0
    %911 = vmatprep.subr.mxu0 0.0
    %912 = vmatpush1.msra.mxu0 0.0
    %913 = vmatprep.subr.mxu0 0.0
    %914 = vmatpush1.msra.mxu0 0.0
    %915 = vmatprep.subr.mxu0 0.0
    %916 = vmatpush1.msra.mxu0 0.0
    %917 = vmatprep.subr.mxu0 0.0
    %918 = vmatpush1.msra.mxu0 0.0
    %919 = vmatprep.subr.mxu0 0.0
    %920 = vmatpush1.msra.mxu0 0.0
    %921 = vmatprep.subr.mxu0 0.0
    %922 = vmatpush1.msra.mxu0 0.0
    %923 = vmatprep.subr.mxu0 0.0
    %924 = vmatpush1.msra.mxu0 0.0
    %925 = vmatprep.subr.mxu0 0.0
    %926 = vmatpush1.msra.mxu0 0.0
    %927 = vmatprep.subr.mxu0 0.0
    %928 = vmatpush1.msra.mxu0 0.0
    %929 = vmatprep.subr.mxu0 0.0
    %930 = vmatpush1.msra.mxu0 0.0
    %931 = vmatprep.subr.mxu0 0.0
    %932 = vmatpush1.msra.mxu0 0.0
    %933 = vmatprep.subr.mxu0 0.0
    %934 = vmatpush1.msra.mxu0 0.0
    %935 = vmatprep.subr.mxu0 0.0
    %936 = vmatpush1.msra.mxu0 0.0
    %937 = vmatprep.subr.mxu0 0.0
    %938 = vmatpush1.msra.mxu0 0.0
    %939 = vmatprep.subr.mxu0 0.0
    %940 = vmatpush1.msra.mxu0 0.0
    %941 = vmatprep.mubr.f32.mxu0 0.0
    %942 = vmatmul.mubr.f32.gmra.mrb[0].mxu0 %v875
    %v943 = vpop.f32.mrb[0].mxu0
    %v944 = vadd.f32 0.0, %v943
    %v945 = vpop.f32.mrb[0].mxu0
    %946 = vdwg.mxu0
    %947 = vrot.lane.b32.xlu0 %v154, 64
    %v948 = vpop.permute.xlu0 %947
    %v951 = vsel %vm168, %v864, 0
    %953 = vmatprep.subr.mxu0 0.0
    %954 = vmatpush1.msra.mxu0 %v948
    %955 = vmatprep.subr.mxu0 0.0
    %956 = vmatpush1.msra.mxu0 0.0
    %957 = vmatprep.subr.mxu0 0.0
    %958 = vmatpush1.msra.mxu0 0.0
    %959 = vmatprep.subr.mxu0 0.0
    %960 = vmatpush1.msra.mxu0 0.0
    %961 = vmatprep.subr.mxu0 0.0
    %962 = vmatpush1.msra.mxu0 0.0
    %963 = vmatprep.subr.mxu0 0.0
    %964 = vmatpush1.msra.mxu0 0.0
    %965 = vmatprep.subr.mxu0 0.0
    %966 = vmatpush1.msra.mxu0 0.0
    %967 = vmatprep.subr.mxu0 0.0
    %968 = vmatpush1.msra.mxu0 0.0
    %969 = vmatprep.subr.mxu0 0.0
    %970 = vmatpush1.msra.mxu0 0.0
    %971 = vmatprep.subr.mxu0 0.0
    %972 = vmatpush1.msra.mxu0 0.0
    %973 = vmatprep.subr.mxu0 0.0
    %974 = vmatpush1.msra.mxu0 0.0
    %975 = vmatprep.subr.mxu0 0.0
    %976 = vmatpush1.msra.mxu0 0.0
    %977 = vmatprep.subr.mxu0 0.0
    %978 = vmatpush1.msra.mxu0 0.0
    %979 = vmatprep.subr.mxu0 0.0
    %980 = vmatpush1.msra.mxu0 0.0
    %981 = vmatprep.subr.mxu0 0.0
    %982 = vmatpush1.msra.mxu0 0.0
    %983 = vmatprep.subr.mxu0 0.0
    %984 = vmatpush1.msra.mxu0 0.0
    %985 = vmatprep.subr.mxu0 0.0
    %986 = vmatpush1.msra.mxu0 0.0
    %987 = vmatprep.subr.mxu0 0.0
    %988 = vmatpush1.msra.mxu0 0.0
    %989 = vmatprep.subr.mxu0 0.0
    %990 = vmatpush1.msra.mxu0 0.0
    %991 = vmatprep.subr.mxu0 0.0
    %992 = vmatpush1.msra.mxu0 0.0
    %993 = vmatprep.subr.mxu0 0.0
    %994 = vmatpush1.msra.mxu0 0.0
    %995 = vmatprep.subr.mxu0 0.0
    %996 = vmatpush1.msra.mxu0 0.0
    %997 = vmatprep.subr.mxu0 0.0
    %998 = vmatpush1.msra.mxu0 0.0
    %999 = vmatprep.subr.mxu0 0.0
    %1000 = vmatpush1.msra.mxu0 0.0
    %1001 = vmatprep.subr.mxu0 0.0
    %1002 = vmatpush1.msra.mxu0 0.0
    %1003 = vmatprep.subr.mxu0 0.0
    %1004 = vmatpush1.msra.mxu0 0.0
    %1005 = vmatprep.subr.mxu0 0.0
    %1006 = vmatpush1.msra.mxu0 0.0
    %1007 = vmatprep.subr.mxu0 0.0
    %1008 = vmatpush1.msra.mxu0 0.0
    %1009 = vmatprep.subr.mxu0 0.0
    %1010 = vmatpush1.msra.mxu0 0.0
    %1011 = vmatprep.subr.mxu0 0.0
    %1012 = vmatpush1.msra.mxu0 0.0
    %1013 = vmatprep.subr.mxu0 0.0
    %1014 = vmatpush1.msra.mxu0 0.0
    %1015 = vmatprep.subr.mxu0 0.0
    %1016 = vmatpush1.msra.mxu0 0.0
    %1017 = vmatprep.mubr.f32.mxu0 0.0
    %1018 = vmatmul.mubr.f32.gmra.mrb[0].mxu0 %v951
    %v1019 = vpop.f32.mrb[0].mxu0
    %v1020 = vadd.f32 0.0, %v1019
    %v1021 = vpop.f32.mrb[0].mxu0
    %1022 = vdwg.mxu0
    %1023 = vrot.lane.b32.xlu0 %v156, 64
    %v1024 = vpop.permute.xlu0 %1023
    %v1027 = vsel %vm168, %v865, 0
    %1029 = vmatprep.subr.mxu0 0.0
    %1030 = vmatpush1.msra.mxu0 %v1024
    %1031 = vmatprep.subr.mxu0 0.0
    %1032 = vmatpush1.msra.mxu0 0.0
    %1033 = vmatprep.subr.mxu0 0.0
    %1034 = vmatpush1.msra.mxu0 0.0
    %1035 = vmatprep.subr.mxu0 0.0
    %1036 = vmatpush1.msra.mxu0 0.0
    %1037 = vmatprep.subr.mxu0 0.0
    %1038 = vmatpush1.msra.mxu0 0.0
    %1039 = vmatprep.subr.mxu0 0.0
    %1040 = vmatpush1.msra.mxu0 0.0
    %1041 = vmatprep.subr.mxu0 0.0
    %1042 = vmatpush1.msra.mxu0 0.0
    %1043 = vmatprep.subr.mxu0 0.0
    %1044 = vmatpush1.msra.mxu0 0.0
    %1045 = vmatprep.subr.mxu0 0.0
    %1046 = vmatpush1.msra.mxu0 0.0
    %1047 = vmatprep.subr.mxu0 0.0
    %1048 = vmatpush1.msra.mxu0 0.0
    %1049 = vmatprep.subr.mxu0 0.0
    %1050 = vmatpush1.msra.mxu0 0.0
    %1051 = vmatprep.subr.mxu0 0.0
    %1052 = vmatpush1.msra.mxu0 0.0
    %1053 = vmatprep.subr.mxu0 0.0
    %1054 = vmatpush1.msra.mxu0 0.0
    %1055 = vmatprep.subr.mxu0 0.0
    %1056 = vmatpush1.msra.mxu0 0.0
    %1057 = vmatprep.subr.mxu0 0.0
    %1058 = vmatpush1.msra.mxu0 0.0
    %1059 = vmatprep.subr.mxu0 0.0
    %1060 = vmatpush1.msra.mxu0 0.0
    %1061 = vmatprep.subr.mxu0 0.0
    %1062 = vmatpush1.msra.mxu0 0.0
    %1063 = vmatprep.subr.mxu0 0.0
    %1064 = vmatpush1.msra.mxu0 0.0
    %1065 = vmatprep.subr.mxu0 0.0
    %1066 = vmatpush1.msra.mxu0 0.0
    %1067 = vmatprep.subr.mxu0 0.0
    %1068 = vmatpush1.msra.mxu0 0.0
    %1069 = vmatprep.subr.mxu0 0.0
    %1070 = vmatpush1.msra.mxu0 0.0
    %1071 = vmatprep.subr.mxu0 0.0
    %1072 = vmatpush1.msra.mxu0 0.0
    %1073 = vmatprep.subr.mxu0 0.0
    %1074 = vmatpush1.msra.mxu0 0.0
    %1075 = vmatprep.subr.mxu0 0.0
    %1076 = vmatpush1.msra.mxu0 0.0
    %1077 = vmatprep.subr.mxu0 0.0
    %1078 = vmatpush1.msra.mxu0 0.0
    %1079 = vmatprep.subr.mxu0 0.0
    %1080 = vmatpush1.msra.mxu0 0.0
    %1081 = vmatprep.subr.mxu0 0.0
    %1082 = vmatpush1.msra.mxu0 0.0
    %1083 = vmatprep.subr.mxu0 0.0
    %1084 = vmatpush1.msra.mxu0 0.0
    %1085 = vmatprep.subr.mxu0 0.0
    %1086 = vmatpush1.msra.mxu0 0.0
    %1087 = vmatprep.subr.mxu0 0.0
    %1088 = vmatpush1.msra.mxu0 0.0
    %1089 = vmatprep.subr.mxu0 0.0
    %1090 = vmatpush1.msra.mxu0 0.0
    %1091 = vmatprep.subr.mxu0 0.0
    %1092 = vmatpush1.msra.mxu0 0.0
    %1093 = vmatprep.mubr.f32.mxu0 0.0
    %1094 = vmatmul.mubr.f32.gmra.mrb[0].mxu0 %v1027
    %v1095 = vpop.f32.mrb[0].mxu0
    %v1096 = vadd.f32 0.0, %v1095
    %v1097 = vpop.f32.mrb[0].mxu0
    %1098 = vdwg.mxu0
    %1099 = vrot.lane.b32.xlu0 %v158, 64
    %v1100 = vpop.permute.xlu0 %1099
    %v1103 = vsel %vm168, %v866, 0
    %1105 = vmatprep.subr.mxu0 0.0
    %1106 = vmatpush1.msra.mxu0 %v1100
    %1107 = vmatprep.subr.mxu0 0.0
    %1108 = vmatpush1.msra.mxu0 0.0
    %1109 = vmatprep.subr.mxu0 0.0
    %1110 = vmatpush1.msra.mxu0 0.0
    %1111 = vmatprep.subr.mxu0 0.0
    %1112 = vmatpush1.msra.mxu0 0.0
    %1113 = vmatprep.subr.mxu0 0.0
    %1114 = vmatpush1.msra.mxu0 0.0
    %1115 = vmatprep.subr.mxu0 0.0
    %1116 = vmatpush1.msra.mxu0 0.0
    %1117 = vmatprep.subr.mxu0 0.0
    %1118 = vmatpush1.msra.mxu0 0.0
    %1119 = vmatprep.subr.mxu0 0.0
    %1120 = vmatpush1.msra.mxu0 0.0
    %1121 = vmatprep.subr.mxu0 0.0
    %1122 = vmatpush1.msra.mxu0 0.0
    %1123 = vmatprep.subr.mxu0 0.0
    %1124 = vmatpush1.msra.mxu0 0.0
    %1125 = vmatprep.subr.mxu0 0.0
    %1126 = vmatpush1.msra.mxu0 0.0
    %1127 = vmatprep.subr.mxu0 0.0
    %1128 = vmatpush1.msra.mxu0 0.0
    %1129 = vmatprep.subr.mxu0 0.0
    %1130 = vmatpush1.msra.mxu0 0.0
    %1131 = vmatprep.subr.mxu0 0.0
    %1132 = vmatpush1.msra.mxu0 0.0
    %1133 = vmatprep.subr.mxu0 0.0
    %1134 = vmatpush1.msra.mxu0 0.0
    %1135 = vmatprep.subr.mxu0 0.0
    %1136 = vmatpush1.msra.mxu0 0.0
    %1137 = vmatprep.subr.mxu0 0.0
    %1138 = vmatpush1.msra.mxu0 0.0
    %1139 = vmatprep.subr.mxu0 0.0
    %1140 = vmatpush1.msra.mxu0 0.0
    %1141 = vmatprep.subr.mxu0 0.0
    %1142 = vmatpush1.msra.mxu0 0.0
    %1143 = vmatprep.subr.mxu0 0.0
    %1144 = vmatpush1.msra.mxu0 0.0
    %1145 = vmatprep.subr.mxu0 0.0
    %1146 = vmatpush1.msra.mxu0 0.0
    %1147 = vmatprep.subr.mxu0 0.0
    %1148 = vmatpush1.msra.mxu0 0.0
    %1149 = vmatprep.subr.mxu0 0.0
    %1150 = vmatpush1.msra.mxu0 0.0
    %1151 = vmatprep.subr.mxu0 0.0
    %1152 = vmatpush1.msra.mxu0 0.0
    %1153 = vmatprep.subr.mxu0 0.0
    %1154 = vmatpush1.msra.mxu0 0.0
    %1155 = vmatprep.subr.mxu0 0.0
    %1156 = vmatpush1.msra.mxu0 0.0
    %1157 = vmatprep.subr.mxu0 0.0
    %1158 = vmatpush1.msra.mxu0 0.0
    %1159 = vmatprep.subr.mxu0 0.0
    %1160 = vmatpush1.msra.mxu0 0.0
    %1161 = vmatprep.subr.mxu0 0.0
    %1162 = vmatpush1.msra.mxu0 0.0
    %1163 = vmatprep.subr.mxu0 0.0
    %1164 = vmatpush1.msra.mxu0 0.0
    %1165 = vmatprep.subr.mxu0 0.0
    %1166 = vmatpush1.msra.mxu0 0.0
    %1167 = vmatprep.subr.mxu0 0.0
    %1168 = vmatpush1.msra.mxu0 0.0
    %1169 = vmatprep.mubr.f32.mxu0 0.0
    %1170 = vmatmul.mubr.f32.gmra.mrb[0].mxu0 %v1103
    %v1171 = vpop.f32.mrb[0].mxu0
    %v1172 = vadd.f32 0.0, %v1171
    %v1173 = vpop.f32.mrb[0].mxu0
    %1174 = vdwg.mxu0
    %1175 = vrot.lane.b32.xlu0 %v149, 64
    %v1176 = vpop.permute.xlu0 %1175
    %v1179 = vsel %vm168, %v867, 0
    %1181 = vmatprep.subr.mxu0 0.0
    %1182 = vmatpush1.msra.mxu0 %v1176
    %1183 = vmatprep.subr.mxu0 0.0
    %1184 = vmatpush1.msra.mxu0 0.0
    %1185 = vmatprep.subr.mxu0 0.0
    %1186 = vmatpush1.msra.mxu0 0.0
    %1187 = vmatprep.subr.mxu0 0.0
    %1188 = vmatpush1.msra.mxu0 0.0
    %1189 = vmatprep.subr.mxu0 0.0
    %1190 = vmatpush1.msra.mxu0 0.0
    %1191 = vmatprep.subr.mxu0 0.0
    %1192 = vmatpush1.msra.mxu0 0.0
    %1193 = vmatprep.subr.mxu0 0.0
    %1194 = vmatpush1.msra.mxu0 0.0
    %1195 = vmatprep.subr.mxu0 0.0
    %1196 = vmatpush1.msra.mxu0 0.0
    %1197 = vmatprep.subr.mxu0 0.0
    %1198 = vmatpush1.msra.mxu0 0.0
    %1199 = vmatprep.subr.mxu0 0.0
    %1200 = vmatpush1.msra.mxu0 0.0
    %1201 = vmatprep.subr.mxu0 0.0
    %1202 = vmatpush1.msra.mxu0 0.0
    %1203 = vmatprep.subr.mxu0 0.0
    %1204 = vmatpush1.msra.mxu0 0.0
    %1205 = vmatprep.subr.mxu0 0.0
    %1206 = vmatpush1.msra.mxu0 0.0
    %1207 = vmatprep.subr.mxu0 0.0
    %1208 = vmatpush1.msra.mxu0 0.0
    %1209 = vmatprep.subr.mxu0 0.0
    %1210 = vmatpush1.msra.mxu0 0.0
    %1211 = vmatprep.subr.mxu0 0.0
    %1212 = vmatpush1.msra.mxu0 0.0
    %1213 = vmatprep.subr.mxu0 0.0
    %1214 = vmatpush1.msra.mxu0 0.0
    %1215 = vmatprep.subr.mxu0 0.0
    %1216 = vmatpush1.msra.mxu0 0.0
    %1217 = vmatprep.subr.mxu0 0.0
    %1218 = vmatpush1.msra.mxu0 0.0
    %1219 = vmatprep.subr.mxu0 0.0
    %1220 = vmatpush1.msra.mxu0 0.0
    %1221 = vmatprep.subr.mxu0 0.0
    %1222 = vmatpush1.msra.mxu0 0.0
    %1223 = vmatprep.subr.mxu0 0.0
    %1224 = vmatpush1.msra.mxu0 0.0
    %1225 = vmatprep.subr.mxu0 0.0
    %1226 = vmatpush1.msra.mxu0 0.0
    %1227 = vmatprep.subr.mxu0 0.0
    %1228 = vmatpush1.msra.mxu0 0.0
    %1229 = vmatprep.subr.mxu0 0.0
    %1230 = vmatpush1.msra.mxu0 0.0
    %1231 = vmatprep.subr.mxu0 0.0
    %1232 = vmatpush1.msra.mxu0 0.0
    %1233 = vmatprep.subr.mxu0 0.0
    %1234 = vmatpush1.msra.mxu0 0.0
    %1235 = vmatprep.subr.mxu0 0.0
    %1236 = vmatpush1.msra.mxu0 0.0
    %1237 = vmatprep.subr.mxu0 0.0
    %1238 = vmatpush1.msra.mxu0 0.0
    %1239 = vmatprep.subr.mxu0 0.0
    %1240 = vmatpush1.msra.mxu0 0.0
    %1241 = vmatprep.subr.mxu0 0.0
    %1242 = vmatpush1.msra.mxu0 0.0
    %1243 = vmatprep.subr.mxu0 0.0
    %1244 = vmatpush1.msra.mxu0 0.0
    %1245 = vmatprep.mubr.f32.mxu0 0.0
    %1246 = vmatmul.mubr.f32.gmra.mrb[0].mxu0 %v1179
    %v1247 = vpop.f32.mrb[0].mxu0
    %v1248 = vadd.f32 0.0, %v1247
    %v1249 = vpop.f32.mrb[0].mxu0
    %1250 = vdwg.mxu0
    %1251 = vrot.lane.b32.xlu0 %v161, 64
    %v1252 = vpop.permute.xlu0 %1251
    %v1255 = vsel %vm168, %v868, 0
    %1257 = vmatprep.subr.mxu0 0.0
    %1258 = vmatpush1.msra.mxu0 %v1252
    %1259 = vmatprep.subr.mxu0 0.0
    %1260 = vmatpush1.msra.mxu0 0.0
    %1261 = vmatprep.subr.mxu0 0.0
    %1262 = vmatpush1.msra.mxu0 0.0
    %1263 = vmatprep.subr.mxu0 0.0
    %1264 = vmatpush1.msra.mxu0 0.0
    %1265 = vmatprep.subr.mxu0 0.0
    %1266 = vmatpush1.msra.mxu0 0.0
    %1267 = vmatprep.subr.mxu0 0.0
    %1268 = vmatpush1.msra.mxu0 0.0
    %1269 = vmatprep.subr.mxu0 0.0
    %1270 = vmatpush1.msra.mxu0 0.0
    %1271 = vmatprep.subr.mxu0 0.0
    %1272 = vmatpush1.msra.mxu0 0.0
    %1273 = vmatprep.subr.mxu0 0.0
    %1274 = vmatpush1.msra.mxu0 0.0
    %1275 = vmatprep.subr.mxu0 0.0
    %1276 = vmatpush1.msra.mxu0 0.0
    %1277 = vmatprep.subr.mxu0 0.0
    %1278 = vmatpush1.msra.mxu0 0.0
    %1279 = vmatprep.subr.mxu0 0.0
    %1280 = vmatpush1.msra.mxu0 0.0
    %1281 = vmatprep.subr.mxu0 0.0
    %1282 = vmatpush1.msra.mxu0 0.0
    %1283 = vmatprep.subr.mxu0 0.0
    %1284 = vmatpush1.msra.mxu0 0.0
    %1285 = vmatprep.subr.mxu0 0.0
    %1286 = vmatpush1.msra.mxu0 0.0
    %1287 = vmatprep.subr.mxu0 0.0
    %1288 = vmatpush1.msra.mxu0 0.0
    %1289 = vmatprep.subr.mxu0 0.0
    %1290 = vmatpush1.msra.mxu0 0.0
    %1291 = vmatprep.subr.mxu0 0.0
    %1292 = vmatpush1.msra.mxu0 0.0
    %1293 = vmatprep.subr.mxu0 0.0
    %1294 = vmatpush1.msra.mxu0 0.0
    %1295 = vmatprep.subr.mxu0 0.0
    %1296 = vmatpush1.msra.mxu0 0.0
    %1297 = vmatprep.subr.mxu0 0.0
    %1298 = vmatpush1.msra.mxu0 0.0
    %1299 = vmatprep.subr.mxu0 0.0
    %1300 = vmatpush1.msra.mxu0 0.0
    %1301 = vmatprep.subr.mxu0 0.0
    %1302 = vmatpush1.msra.mxu0 0.0
    %1303 = vmatprep.subr.mxu0 0.0
    %1304 = vmatpush1.msra.mxu0 0.0
    %1305 = vmatprep.subr.mxu0 0.0
    %1306 = vmatpush1.msra.mxu0 0.0
    %1307 = vmatprep.subr.mxu0 0.0
    %1308 = vmatpush1.msra.mxu0 0.0
    %1309 = vmatprep.subr.mxu0 0.0
    %1310 = vmatpush1.msra.mxu0 0.0
    %1311 = vmatprep.subr.mxu0 0.0
    %1312 = vmatpush1.msra.mxu0 0.0
    %1313 = vmatprep.subr.mxu0 0.0
    %1314 = vmatpush1.msra.mxu0 0.0
    %1315 = vmatprep.subr.mxu0 0.0
    %1316 = vmatpush1.msra.mxu0 0.0
    %1317 = vmatprep.subr.mxu0 0.0
    %1318 = vmatpush1.msra.mxu0 0.0
    %1319 = vmatprep.subr.mxu0 0.0
    %1320 = vmatpush1.msra.mxu0 0.0
    %1321 = vmatprep.mubr.f32.mxu0 0.0
    %1322 = vmatmul.mubr.f32.gmra.mrb[0].mxu0 %v1255
    %v1323 = vpop.f32.mrb[0].mxu0
    %v1324 = vadd.f32 0.0, %v1323
    %v1325 = vpop.f32.mrb[0].mxu0
    %1326 = vdwg.mxu0
    %1327 = vrot.lane.b32.xlu0 %v163, 64
    %v1328 = vpop.permute.xlu0 %1327
    %v1331 = vsel %vm168, %v869, 0
    %1333 = vmatprep.subr.mxu0 0.0
    %1334 = vmatpush1.msra.mxu0 %v1328
    %1335 = vmatprep.subr.mxu0 0.0
    %1336 = vmatpush1.msra.mxu0 0.0
    %1337 = vmatprep.subr.mxu0 0.0
    %1338 = vmatpush1.msra.mxu0 0.0
    %1339 = vmatprep.subr.mxu0 0.0
    %1340 = vmatpush1.msra.mxu0 0.0
    %1341 = vmatprep.subr.mxu0 0.0
    %1342 = vmatpush1.msra.mxu0 0.0
    %1343 = vmatprep.subr.mxu0 0.0
    %1344 = vmatpush1.msra.mxu0 0.0
    %1345 = vmatprep.subr.mxu0 0.0
    %1346 = vmatpush1.msra.mxu0 0.0
    %1347 = vmatprep.subr.mxu0 0.0
    %1348 = vmatpush1.msra.mxu0 0.0
    %1349 = vmatprep.subr.mxu0 0.0
    %1350 = vmatpush1.msra.mxu0 0.0
    %1351 = vmatprep.subr.mxu0 0.0
    %1352 = vmatpush1.msra.mxu0 0.0
    %1353 = vmatprep.subr.mxu0 0.0
    %1354 = vmatpush1.msra.mxu0 0.0
    %1355 = vmatprep.subr.mxu0 0.0
    %1356 = vmatpush1.msra.mxu0 0.0
    %1357 = vmatprep.subr.mxu0 0.0
    %1358 = vmatpush1.msra.mxu0 0.0
    %1359 = vmatprep.subr.mxu0 0.0
    %1360 = vmatpush1.msra.mxu0 0.0
    %1361 = vmatprep.subr.mxu0 0.0
    %1362 = vmatpush1.msra.mxu0 0.0
    %1363 = vmatprep.subr.mxu0 0.0
    %1364 = vmatpush1.msra.mxu0 0.0
    %1365 = vmatprep.subr.mxu0 0.0
    %1366 = vmatpush1.msra.mxu0 0.0
    %1367 = vmatprep.subr.mxu0 0.0
    %1368 = vmatpush1.msra.mxu0 0.0
    %1369 = vmatprep.subr.mxu0 0.0
    %1370 = vmatpush1.msra.mxu0 0.0
    %1371 = vmatprep.subr.mxu0 0.0
    %1372 = vmatpush1.msra.mxu0 0.0
    %1373 = vmatprep.subr.mxu0 0.0
    %1374 = vmatpush1.msra.mxu0 0.0
    %1375 = vmatprep.subr.mxu0 0.0
    %1376 = vmatpush1.msra.mxu0 0.0
    %1377 = vmatprep.subr.mxu0 0.0
    %1378 = vmatpush1.msra.mxu0 0.0
    %1379 = vmatprep.subr.mxu0 0.0
    %1380 = vmatpush1.msra.mxu0 0.0
    %1381 = vmatprep.subr.mxu0 0.0
    %1382 = vmatpush1.msra.mxu0 0.0
    %1383 = vmatprep.subr.mxu0 0.0
    %1384 = vmatpush1.msra.mxu0 0.0
    %1385 = vmatprep.subr.mxu0 0.0
    %1386 = vmatpush1.msra.mxu0 0.0
    %1387 = vmatprep.subr.mxu0 0.0
    %1388 = vmatpush1.msra.mxu0 0.0
    %1389 = vmatprep.subr.mxu0 0.0
    %1390 = vmatpush1.msra.mxu0 0.0
    %1391 = vmatprep.subr.mxu0 0.0
    %1392 = vmatpush1.msra.mxu0 0.0
    %1393 = vmatprep.subr.mxu0 0.0
    %1394 = vmatpush1.msra.mxu0 0.0
    %1395 = vmatprep.subr.mxu0 0.0
    %1396 = vmatpush1.msra.mxu0 0.0
    %1397 = vmatprep.mubr.f32.mxu0 0.0
    %1398 = vmatmul.mubr.f32.gmra.mrb[0].mxu0 %v1331
    %v1399 = vpop.f32.mrb[0].mxu0
    %v1400 = vadd.f32 0.0, %v1399
    %v1401 = vpop.f32.mrb[0].mxu0
    %1402 = vdwg.mxu0
    %1403 = vrot.lane.b32.xlu0 %v165, 64
    %v1404 = vpop.permute.xlu0 %1403
    %v1407 = vsel %vm168, %v870, 0
    %1409 = vmatprep.subr.mxu0 0.0
    %1410 = vmatpush1.msra.mxu0 %v1404
    %1411 = vmatprep.subr.mxu0 0.0
    %1412 = vmatpush1.msra.mxu0 0.0
    %1413 = vmatprep.subr.mxu0 0.0
    %1414 = vmatpush1.msra.mxu0 0.0
    %1415 = vmatprep.subr.mxu0 0.0
    %1416 = vmatpush1.msra.mxu0 0.0
    %1417 = vmatprep.subr.mxu0 0.0
    %1418 = vmatpush1.msra.mxu0 0.0
    %1419 = vmatprep.subr.mxu0 0.0
    %1420 = vmatpush1.msra.mxu0 0.0
    %1421 = vmatprep.subr.mxu0 0.0
    %1422 = vmatpush1.msra.mxu0 0.0
    %1423 = vmatprep.subr.mxu0 0.0
    %1424 = vmatpush1.msra.mxu0 0.0
    %1425 = vmatprep.subr.mxu0 0.0
    %1426 = vmatpush1.msra.mxu0 0.0
    %1427 = vmatprep.subr.mxu0 0.0
    %1428 = vmatpush1.msra.mxu0 0.0
    %1429 = vmatprep.subr.mxu0 0.0
    %1430 = vmatpush1.msra.mxu0 0.0
    %1431 = vmatprep.subr.mxu0 0.0
    %1432 = vmatpush1.msra.mxu0 0.0
    %1433 = vmatprep.subr.mxu0 0.0
    %1434 = vmatpush1.msra.mxu0 0.0
    %1435 = vmatprep.subr.mxu0 0.0
    %1436 = vmatpush1.msra.mxu0 0.0
    %1437 = vmatprep.subr.mxu0 0.0
    %1438 = vmatpush1.msra.mxu0 0.0
    %1439 = vmatprep.subr.mxu0 0.0
    %1440 = vmatpush1.msra.mxu0 0.0
    %1441 = vmatprep.subr.mxu0 0.0
    %1442 = vmatpush1.msra.mxu0 0.0
    %1443 = vmatprep.subr.mxu0 0.0
    %1444 = vmatpush1.msra.mxu0 0.0
    %1445 = vmatprep.subr.mxu0 0.0
    %1446 = vmatpush1.msra.mxu0 0.0
    %1447 = vmatprep.subr.mxu0 0.0
    %1448 = vmatpush1.msra.mxu0 0.0
    %1449 = vmatprep.subr.mxu0 0.0
    %1450 = vmatpush1.msra.mxu0 0.0
    %1451 = vmatprep.subr.mxu0 0.0
    %1452 = vmatpush1.msra.mxu0 0.0
    %1453 = vmatprep.subr.mxu0 0.0
    %1454 = vmatpush1.msra.mxu0 0.0
    %1455 = vmatprep.subr.mxu0 0.0
    %1456 = vmatpush1.msra.mxu0 0.0
    %1457 = vmatprep.subr.mxu0 0.0
    %1458 = vmatpush1.msra.mxu0 0.0
    %1459 = vmatprep.subr.mxu0 0.0
    %1460 = vmatpush1.msra.mxu0 0.0
    %1461 = vmatprep.subr.mxu0 0.0
    %1462 = vmatpush1.msra.mxu0 0.0
    %1463 = vmatprep.subr.mxu0 0.0
    %1464 = vmatpush1.msra.mxu0 0.0
    %1465 = vmatprep.subr.mxu0 0.0
    %1466 = vmatpush1.msra.mxu0 0.0
    %1467 = vmatprep.subr.mxu0 0.0
    %1468 = vmatpush1.msra.mxu0 0.0
    %1469 = vmatprep.subr.mxu0 0.0
    %1470 = vmatpush1.msra.mxu0 0.0
    %1471 = vmatprep.subr.mxu0 0.0
    %1472 = vmatpush1.msra.mxu0 0.0
    %1473 = vmatprep.mubr.f32.mxu0 0.0
    %1474 = vmatmul.mubr.f32.gmra.mrb[0].mxu0 %v1407
    %v1475 = vpop.f32.mrb[0].mxu0
    %v1476 = vadd.f32 0.0, %v1475
    %v1477 = vpop.f32.mrb[0].mxu0
    %1478 = vdwg.mxu0
    %1480 = vrot.lane.b32.xlu0 %v1020, 8
    %v1481 = vpop.permute.xlu0 %1480
    %1484 = vrot.lane.b32.xlu0 %v1096, 16
    %v1485 = vpop.permute.xlu0 %1484
    %1488 = vrot.lane.b32.xlu0 %v1172, 24
    %v1489 = vpop.permute.xlu0 %1488
    %v1491 = vsel %vm168, %v944, %v1481
    %vm1492 = vcmask 130048
    %v1493 = vsel %vm1492, %v1491, %v1485
    %vm1494 = vcmask 195584
    %v1495 = vsel %vm1494, %v1493, %v1489
    %1497 = vrot.lane.b32.xlu0 %v1324, 8
    %v1498 = vpop.permute.xlu0 %1497
    %1501 = vrot.lane.b32.xlu0 %v1400, 16
    %v1502 = vpop.permute.xlu0 %1501
    %1505 = vrot.lane.b32.xlu0 %v1476, 24
    %v1506 = vpop.permute.xlu0 %1505
    %v1508 = vsel %vm168, %v1248, %v1498
    %v1509 = vsel %vm1492, %v1508, %v1502
    %v1510 = vsel %vm1494, %v1509, %v1506
    %v1511 = vld [vmem:[%s2] sm:$0xff]
    %v1512 = vld [vmem:[%s2 + $0x8] sm:$0xff]
    %v1513 = vld [vmem:[%s2 + $0x10] sm:$0xff]
    %v1514 = vld [vmem:[%s2 + $0x18] sm:$0xff]
    %v1515 = vld [vmem:[%s3] sm:$0x1]
    %v1517 = vlaneseq
    %v1518 = vshrl.u32 %v1517, 7
    %v1519 = vsub.s32 0, %v1518
    %v1520 = vrot.slane %v1515, %v1519
    %vm1522 = vcmask 261120
    %v1524 = vsel %vm1522, %v1495, 0
    %v1527 = vsel %vm1522, %v1510, 0
    %1529 = vmatprep.subr.mxu0 0.0
    %1530 = vmatpush1.msra.mxu0 %v1511
    %1531 = vmatprep.subr.mxu0 0.0
    %1532 = vmatpush1.msra.mxu0 %v1512
    %1533 = vmatprep.subr.mxu0 0.0
    %1534 = vmatpush1.msra.mxu0 %v1513
    %1535 = vmatprep.subr.mxu0 0.0
    %1536 = vmatpush1.msra.mxu0 %v1514
    %1537 = vmatprep.subr.mxu0 0.0
    %1538 = vmatpush1.msra.mxu0 0.0
    %1539 = vmatprep.subr.mxu0 0.0
    %1540 = vmatpush1.msra.mxu0 0.0
    %1541 = vmatprep.subr.mxu0 0.0
    %1542 = vmatpush1.msra.mxu0 0.0
    %1543 = vmatprep.subr.mxu0 0.0
    %1544 = vmatpush1.msra.mxu0 0.0
    %1545 = vmatprep.subr.mxu0 0.0
    %1546 = vmatpush1.msra.mxu0 0.0
    %1547 = vmatprep.subr.mxu0 0.0
    %1548 = vmatpush1.msra.mxu0 0.0
    %1549 = vmatprep.subr.mxu0 0.0
    %1550 = vmatpush1.msra.mxu0 0.0
    %1551 = vmatprep.subr.mxu0 0.0
    %1552 = vmatpush1.msra.mxu0 0.0
    %1553 = vmatprep.subr.mxu0 0.0
    %1554 = vmatpush1.msra.mxu0 0.0
    %1555 = vmatprep.subr.mxu0 0.0
    %1556 = vmatpush1.msra.mxu0 0.0
    %1557 = vmatprep.subr.mxu0 0.0
    %1558 = vmatpush1.msra.mxu0 0.0
    %1559 = vmatprep.subr.mxu0 0.0
    %1560 = vmatpush1.msra.mxu0 0.0
    %1561 = vmatprep.subr.mxu0 0.0
    %1562 = vmatpush1.msra.mxu0 0.0
    %1563 = vmatprep.subr.mxu0 0.0
    %1564 = vmatpush1.msra.mxu0 0.0
    %1565 = vmatprep.subr.mxu0 0.0
    %1566 = vmatpush1.msra.mxu0 0.0
    %1567 = vmatprep.subr.mxu0 0.0
    %1568 = vmatpush1.msra.mxu0 0.0
    %1569 = vmatprep.subr.mxu0 0.0
    %1570 = vmatpush1.msra.mxu0 0.0
    %1571 = vmatprep.subr.mxu0 0.0
    %1572 = vmatpush1.msra.mxu0 0.0
    %1573 = vmatprep.subr.mxu0 0.0
    %1574 = vmatpush1.msra.mxu0 0.0
    %1575 = vmatprep.subr.mxu0 0.0
    %1576 = vmatpush1.msra.mxu0 0.0
    %1577 = vmatprep.subr.mxu0 0.0
    %1578 = vmatpush1.msra.mxu0 0.0
    %1579 = vmatprep.subr.mxu0 0.0
    %1580 = vmatpush1.msra.mxu0 0.0
    %1581 = vmatprep.subr.mxu0 0.0
    %1582 = vmatpush1.msra.mxu0 0.0
    %1583 = vmatprep.subr.mxu0 0.0
    %1584 = vmatpush1.msra.mxu0 0.0
    %1585 = vmatprep.subr.mxu0 0.0
    %1586 = vmatpush1.msra.mxu0 0.0
    %1587 = vmatprep.subr.mxu0 0.0
    %1588 = vmatpush1.msra.mxu0 0.0
    %1589 = vmatprep.subr.mxu0 0.0
    %1590 = vmatpush1.msra.mxu0 0.0
    %1591 = vmatprep.subr.mxu0 0.0
    %1592 = vmatpush1.msra.mxu0 0.0
    %1593 = vmatprep.mubr.f32.mxu0 0.0
    %1594 = vmatmul.mubr.f32.gmra.mrb[0].mxu0 %v1524
    %v1595 = vpop.f32.mrb[0].mxu0
    %v1596 = vadd.f32 %v1520, %v1595
    %v1597 = vpop.f32.mrb[0].mxu0
    %1598 = vmatprep.mubr.f32.mxu0 0.0
    %1599 = vmatmul.mubr.f32.gmra.mrb[0].mxu0 %v1527
    %v1600 = vpop.f32.mrb[0].mxu0
    %v1601 = vadd.f32 %v1520, %v1600
    %v1602 = vpop.f32.mrb[0].mxu0
    %1603 = vdwg.mxu0
    %v1604 = vadd.f32 %v1596, %v56
    %v1605 = vadd.f32 %v1601, %v57
    %v1606 = vld [vmem:[%s8] sm:$0x1]
    %v1607 = vld [vmem:[%s9] sm:$0x1]
    %v1608 = vsel %vm1522, %v1604, 0.0
    %1609 = vadd.xlane.f32.xlu0 %v1608
    %v1610 = vpop.xlane.xlu0 %1609
    %v1611 = vsel %vm1522, %v1605, 0.0
    %1612 = vadd.xlane.f32.xlu0 %v1611
    %v1613 = vpop.xlane.xlu0 %1612
    %v1614 = vrcp.pop 32.0
    %v1615 = vmul.f32 %v1610, %v1614
    %v1616 = vmul.f32 %v1613, %v1614
    %v1617 = vsub.f32 %v1604, %v1615
    %v1618 = vsub.f32 %v1605, %v1616
    %v1619 = vmul.f32 %v1617, %v1617
    %v1620 = vmul.f32 %v1618, %v1618
    %v1621 = vsel %vm1522, %v1619, 0.0
    %1622 = vadd.xlane.f32.xlu0 %v1621
    %v1623 = vpop.xlane.xlu0 %1622
    %v1624 = vsel %vm1522, %v1620, 0.0
    %1625 = vadd.xlane.f32.xlu0 %v1624
    %v1626 = vpop.xlane.xlu0 %1625
    %v1627 = vmul.f32 %v1623, %v1614
    %v1628 = vmul.f32 %v1626, %v1614
    %v1629 = vadd.f32 %v1627, 1e-05
    %v1630 = vadd.f32 %v1628, 1e-05
    %v1631 = vrsqrt.pop %v1629
    %v1632 = vrsqrt.pop %v1630
    %v1633 = vmul.f32 %v1617, %v1631
    %v1634 = vmul.f32 %v1618, %v1632
    %v1636 = vlaneseq
    %v1637 = vshrl.u32 %v1636, 7
    %v1638 = vsub.s32 0, %v1637
    %v1639 = vrot.slane %v1606, %v1638
    %v1641 = vmul.f32 %v1633, %v1639
    %v1642 = vmul.f32 %v1634, %v1639
    %v1644 = vlaneseq
    %v1645 = vshrl.u32 %v1644, 7
    %v1646 = vsub.s32 0, %v1645
    %v1647 = vrot.slane %v1607, %v1646
    %v1649 = vadd.f32 %v1641, %v1647
    %v1650 = vadd.f32 %v1642, %v1647
    %v1651 = vld [vmem:[%s4] sm:$0xff]
    %v1652 = vld [vmem:[%s4 + $0x8] sm:$0xff]
    %v1653 = vld [vmem:[%s4 + $0x10] sm:$0xff]
    %v1654 = vld [vmem:[%s4 + $0x18] sm:$0xff]
    %v1655 = vld [vmem:[%s5] sm:$0x1]
    %v1657 = vlaneseq
    %v1658 = vshrl.u32 %v1657, 7
    %v1659 = vsub.s32 0, %v1658
    %v1660 = vrot.slane %v1655, %v1659
    %v1663 = vsel %vm1522, %v1649, 0
    %v1666 = vsel %vm1522, %v1650, 0
    %1668 = vmatprep.subr.mxu0 0.0
    %1669 = vmatpush1.msra.mxu0 %v1651
    %1670 = vmatprep.subr.mxu0 0.0
    %1671 = vmatpush1.msra.mxu0 %v1652
    %1672 = vmatprep.subr.mxu0 0.0
    %1673 = vmatpush1.msra.mxu0 %v1653
    %1674 = vmatprep.subr.mxu0 0.0
    %1675 = vmatpush1.msra.mxu0 %v1654
    %1676 = vmatprep.subr.mxu0 0.0
    %1677 = vmatpush1.msra.mxu0 0.0
    %1678 = vmatprep.subr.mxu0 0.0
    %1679 = vmatpush1.msra.mxu0 0.0
    %1680 = vmatprep.subr.mxu0 0.0
    %1681 = vmatpush1.msra.mxu0 0.0
    %1682 = vmatprep.subr.mxu0 0.0
    %1683 = vmatpush1.msra.mxu0 0.0
    %1684 = vmatprep.subr.mxu0 0.0
    %1685 = vmatpush1.msra.mxu0 0.0
    %1686 = vmatprep.subr.mxu0 0.0
    %1687 = vmatpush1.msra.mxu0 0.0
    %1688 = vmatprep.subr.mxu0 0.0
    %1689 = vmatpush1.msra.mxu0 0.0
    %1690 = vmatprep.subr.mxu0 0.0
    %1691 = vmatpush1.msra.mxu0 0.0
    %1692 = vmatprep.subr.mxu0 0.0
    %1693 = vmatpush1.msra.mxu0 0.0
    %1694 = vmatprep.subr.mxu0 0.0
    %1695 = vmatpush1.msra.mxu0 0.0
    %1696 = vmatprep.subr.mxu0 0.0
    %1697 = vmatpush1.msra.mxu0 0.0
    %1698 = vmatprep.subr.mxu0 0.0
    %1699 = vmatpush1.msra.mxu0 0.0
    %1700 = vmatprep.subr.mxu0 0.0
    %1701 = vmatpush1.msra.mxu0 0.0
    %1702 = vmatprep.subr.mxu0 0.0
    %1703 = vmatpush1.msra.mxu0 0.0
    %1704 = vmatprep.subr.mxu0 0.0
    %1705 = vmatpush1.msra.mxu0 0.0
    %1706 = vmatprep.subr.mxu0 0.0
    %1707 = vmatpush1.msra.mxu0 0.0
    %1708 = vmatprep.subr.mxu0 0.0
    %1709 = vmatpush1.msra.mxu0 0.0
    %1710 = vmatprep.subr.mxu0 0.0
    %1711 = vmatpush1.msra.mxu0 0.0
    %1712 = vmatprep.subr.mxu0 0.0
    %1713 = vmatpush1.msra.mxu0 0.0
    %1714 = vmatprep.subr.mxu0 0.0
    %1715 = vmatpush1.msra.mxu0 0.0
    %1716 = vmatprep.subr.mxu0 0.0
    %1717 = vmatpush1.msra.mxu0 0.0
    %1718 = vmatprep.subr.mxu0 0.0
    %1719 = vmatpush1.msra.mxu0 0.0
    %1720 = vmatprep.subr.mxu0 0.0
    %1721 = vmatpush1.msra.mxu0 0.0
    %1722 = vmatprep.subr.mxu0 0.0
    %1723 = vmatpush1.msra.mxu0 0.0
    %1724 = vmatprep.subr.mxu0 0.0
    %1725 = vmatpush1.msra.mxu0 0.0
    %1726 = vmatprep.subr.mxu0 0.0
    %1727 = vmatpush1.msra.mxu0 0.0
    %1728 = vmatprep.subr.mxu0 0.0
    %1729 = vmatpush1.msra.mxu0 0.0
    %1730 = vmatprep.subr.mxu0 0.0
    %1731 = vmatpush1.msra.mxu0 0.0
    %1732 = vmatprep.mubr.f32.mxu0 0.0
    %1733 = vmatmul.mubr.f32.gmra.mrb[0].mxu0 %v1663
    %v1734 = vpop.f32.mrb[0].mxu0
    %v1735 = vadd.f32 %v1660, %v1734
    %v1736 = vpop.f32.mrb[0].mxu0
    %1737 = vmatprep.mubr.f32.mxu0 0.0
    %1738 = vmatmul.mubr.f32.gmra.mrb[0].mxu0 %v1666
    %v1739 = vpop.f32.mrb[0].mxu0
    %v1740 = vadd.f32 %v1660, %v1739
    %v1741 = vpop.f32.mrb[0].mxu0
    %1742 = vdwg.mxu0
    %v1743 = vmax.f32 %v1735, 0.0
    %v1744 = vmax.f32 %v1740, 0.0
    %v1745 = vld [vmem:[%s6] sm:$0xff]
    %v1746 = vld [vmem:[%s6 + $0x8] sm:$0xff]
    %v1747 = vld [vmem:[%s6 + $0x10] sm:$0xff]
    %v1748 = vld [vmem:[%s6 + $0x18] sm:$0xff]
    %v1749 = vld [vmem:[%s6 + $0x20] sm:$0xff]
    %v1750 = vld [vmem:[%s6 + $0x28] sm:$0xff]
    %v1751 = vld [vmem:[%s6 + $0x30] sm:$0xff]
    %v1752 = vld [vmem:[%s6 + $0x38] sm:$0xff]
    %v1753 = vld [vmem:[%s6 + $0x40] sm:$0xff]
    %v1754 = vld [vmem:[%s6 + $0x48] sm:$0xff]
    %v1755 = vld [vmem:[%s6 + $0x50] sm:$0xff]
    %v1756 = vld [vmem:[%s6 + $0x58] sm:$0xff]
    %v1757 = vld [vmem:[%s6 + $0x60] sm:$0xff]
    %v1758 = vld [vmem:[%s6 + $0x68] sm:$0xff]
    %v1759 = vld [vmem:[%s6 + $0x70] sm:$0xff]
    %v1760 = vld [vmem:[%s6 + $0x78] sm:$0xff]
    %v1761 = vld [vmem:[%s7] sm:$0x1]
    %v1763 = vlaneseq
    %v1764 = vshrl.u32 %v1763, 7
    %v1765 = vsub.s32 0, %v1764
    %v1766 = vrot.slane %v1761, %v1765
    %1768 = vmatprep.subr.mxu0 0.0
    %1769 = vmatpush1.msra.mxu0 %v1745
    %1770 = vmatprep.subr.mxu0 0.0
    %1771 = vmatpush1.msra.mxu0 %v1746
    %1772 = vmatprep.subr.mxu0 0.0
    %1773 = vmatpush1.msra.mxu0 %v1747
    %1774 = vmatprep.subr.mxu0 0.0
    %1775 = vmatpush1.msra.mxu0 %v1748
    %1776 = vmatprep.subr.mxu0 0.0
    %1777 = vmatpush1.msra.mxu0 %v1749
    %1778 = vmatprep.subr.mxu0 0.0
    %1779 = vmatpush1.msra.mxu0 %v1750
    %1780 = vmatprep.subr.mxu0 0.0
    %1781 = vmatpush1.msra.mxu0 %v1751
    %1782 = vmatprep.subr.mxu0 0.0
    %1783 = vmatpush1.msra.mxu0 %v1752
    %1784 = vmatprep.subr.mxu0 0.0
    %1785 = vmatpush1.msra.mxu0 %v1753
    %1786 = vmatprep.subr.mxu0 0.0
    %1787 = vmatpush1.msra.mxu0 %v1754
    %1788 = vmatprep.subr.mxu0 0.0
    %1789 = vmatpush1.msra.mxu0 %v1755
    %1790 = vmatprep.subr.mxu0 0.0
    %1791 = vmatpush1.msra.mxu0 %v1756
    %1792 = vmatprep.subr.mxu0 0.0
    %1793 = vmatpush1.msra.mxu0 %v1757
    %1794 = vmatprep.subr.mxu0 0.0
    %1795 = vmatpush1.msra.mxu0 %v1758
    %1796 = vmatprep.subr.mxu0 0.0
    %1797 = vmatpush1.msra.mxu0 %v1759
    %1798 = vmatprep.subr.mxu0 0.0
    %1799 = vmatpush1.msra.mxu0 %v1760
    %1800 = vmatprep.subr.mxu0 0.0
    %1801 = vmatpush1.msra.mxu0 0.0
    %1802 = vmatprep.subr.mxu0 0.0
    %1803 = vmatpush1.msra.mxu0 0.0
    %1804 = vmatprep.subr.mxu0 0.0
    %1805 = vmatpush1.msra.mxu0 0.0
    %1806 = vmatprep.subr.mxu0 0.0
    %1807 = vmatpush1.msra.mxu0 0.0
    %1808 = vmatprep.subr.mxu0 0.0
    %1809 = vmatpush1.msra.mxu0 0.0
    %1810 = vmatprep.subr.mxu0 0.0
    %1811 = vmatpush1.msra.mxu0 0.0
    %1812 = vmatprep.subr.mxu0 0.0
    %1813 = vmatpush1.msra.mxu0 0.0
    %1814 = vmatprep.subr.mxu0 0.0
    %1815 = vmatpush1.msra.mxu0 0.0
    %1816 = vmatprep.subr.mxu0 0.0
    %1817 = vmatpush1.msra.mxu0 0.0
    %1818 = vmatprep.subr.mxu0 0.0
    %1819 = vmatpush1.msra.mxu0 0.0
    %1820 = vmatprep.subr.mxu0 0.0
    %1821 = vmatpush1.msra.mxu0 0.0
    %1822 = vmatprep.subr.mxu0 0.0
    %1823 = vmatpush1.msra.mxu0 0.0
    %1824 = vmatprep.subr.mxu0 0.0
    %1825 = vmatpush1.msra.mxu0 0.0
    %1826 = vmatprep.subr.mxu0 0.0
    %1827 = vmatpush1.msra.mxu0 0.0
    %1828 = vmatprep.subr.mxu0 0.0
    %1829 = vmatpush1.msra.mxu0 0.0
    %1830 = vmatprep.subr.mxu0 0.0
    %1831 = vmatpush1.msra.mxu0 0.0
    %1832 = vmatprep.mubr.f32.mxu0 0.0
    %1833 = vmatmul.mubr.f32.gmra.mrb[0].mxu0 %v1743
    %v1834 = vpop.f32.mrb[0].mxu0
    %v1835 = vadd.f32 %v1766, %v1834
    %v1836 = vpop.f32.mrb[0].mxu0
    %1837 = vmatprep.mubr.f32.mxu0 0.0
    %1838 = vmatmul.mubr.f32.gmra.mrb[0].mxu0 %v1744
    %v1839 = vpop.f32.mrb[0].mxu0
    %v1840 = vadd.f32 %v1766, %v1839
    %v1841 = vpop.f32.mrb[0].mxu0
    %1842 = vdwg.mxu0
    %v1843 = vadd.f32 %v1835, %v1649
    %v1844 = vadd.f32 %v1840, %v1650
    %v1845 = vld [vmem:[%s10] sm:$0x1]
    %v1846 = vld [vmem:[%s11] sm:$0x1]
    %v1847 = vsel %vm1522, %v1843, 0.0
    %1848 = vadd.xlane.f32.xlu0 %v1847
    %v1849 = vpop.xlane.xlu0 %1848
    %v1850 = vsel %vm1522, %v1844, 0.0
    %1851 = vadd.xlane.f32.xlu0 %v1850
    %v1852 = vpop.xlane.xlu0 %1851
    %v1853 = vmul.f32 %v1849, %v1614
    %v1854 = vmul.f32 %v1852, %v1614
    %v1855 = vsub.f32 %v1843, %v1853
    %v1856 = vsub.f32 %v1844, %v1854
    %v1857 = vmul.f32 %v1855, %v1855
    %v1858 = vmul.f32 %v1856, %v1856
    %v1859 = vsel %vm1522, %v1857, 0.0
    %1860 = vadd.xlane.f32.xlu0 %v1859
    %v1861 = vpop.xlane.xlu0 %1860
    %v1862 = vsel %vm1522, %v1858, 0.0
    %1863 = vadd.xlane.f32.xlu0 %v1862
    %v1864 = vpop.xlane.xlu0 %1863
    %v1865 = vmul.f32 %v1861, %v1614
    %v1866 = vmul.f32 %v1864, %v1614
    %v1867 = vadd.f32 %v1865, 1e-05
    %v1868 = vadd.f32 %v1866, 1e-05
    %v1869 = vrsqrt.pop %v1867
    %v1870 = vrsqrt.pop %v1868
    %v1871 = vmul.f32 %v1855, %v1869
    %v1872 = vmul.f32 %v1856, %v1870
    %v1874 = vlaneseq
    %v1875 = vshrl.u32 %v1874, 7
    %v1876 = vsub.s32 0, %v1875
    %v1877 = vrot.slane %v1845, %v1876
    %v1879 = vmul.f32 %v1871, %v1877
    %v1880 = vmul.f32 %v1872, %v1877
    %v1882 = vlaneseq
    %v1883 = vshrl.u32 %v1882, 7
    %v1884 = vsub.s32 0, %v1883
    %v1885 = vrot.slane %v1846, %v1884
    %v1887 = vadd.f32 %v1879, %v1885
    %v1888 = vadd.f32 %v1880, %v1885
    %v1890 = vrot.slane %v1887, 1
    %1891 = vrot.lane.b32.xlu0 %v1890, 32
    %v1892 = vpop.permute.xlu0 %1891
    %v1894 = vrot.slane %v1887, 2
    %1895 = vrot.lane.b32.xlu0 %v1894, 64
    %v1896 = vpop.permute.xlu0 %1895
    %v1898 = vrot.slane %v1887, 3
    %1899 = vrot.lane.b32.xlu0 %v1898, 96
    %v1900 = vpop.permute.xlu0 %1899
    %v1902 = vrot.slane %v1887, 4
    %v1904 = vrot.slane %v1887, 5
    %1905 = vrot.lane.b32.xlu0 %v1904, 32
    %v1906 = vpop.permute.xlu0 %1905
    %v1908 = vrot.slane %v1887, 6
    %1909 = vrot.lane.b32.xlu0 %v1908, 64
    %v1910 = vpop.permute.xlu0 %1909
    %v1912 = vrot.slane %v1887, 7
    %1913 = vrot.lane.b32.xlu0 %v1912, 96
    %v1914 = vpop.permute.xlu0 %1913
    %v1917 = vrot.slane %v1888, 1
    %1918 = vrot.lane.b32.xlu0 %v1917, 32
    %v1919 = vpop.permute.xlu0 %1918
    %v1921 = vrot.slane %v1888, 2
    %1922 = vrot.lane.b32.xlu0 %v1921, 64
    %v1923 = vpop.permute.xlu0 %1922
    %v1925 = vrot.slane %v1888, 3
    %1926 = vrot.lane.b32.xlu0 %v1925, 96
    %v1927 = vpop.permute.xlu0 %1926
    %v1929 = vrot.slane %v1888, 4
    %v1931 = vrot.slane %v1888, 5
    %1932 = vrot.lane.b32.xlu0 %v1931, 32
    %v1933 = vpop.permute.xlu0 %1932
    %v1935 = vrot.slane %v1888, 6
    %1936 = vrot.lane.b32.xlu0 %v1935, 64
    %v1937 = vpop.permute.xlu0 %1936
    %v1939 = vrot.slane %v1888, 7
    %1940 = vrot.lane.b32.xlu0 %v1939, 96
    %v1941 = vpop.permute.xlu0 %1940
    %v1943 = vsel %vm1522, %v1887, %v1892
    %vm1944 = vcmask 523264
    %v1945 = vsel %vm1944, %v1943, %v1896
    %v1946 = vsel %vm70, %v1945, %v1900
    %v1947 = vsel %vm1522, %v1902, %v1906
    %v1948 = vsel %vm1944, %v1947, %v1910
    %v1949 = vsel %vm70, %v1948, %v1914
    %v1950 = vsel %vm1522, %v1888, %v1919
    %v1951 = vsel %vm1944, %v1950, %v1923
    %v1952 = vsel %vm70, %v1951, %v1927
    %v1953 = vsel %vm1522, %v1929, %v1933
    %v1954 = vsel %vm1944, %v1953, %v1937
    %v1955 = vsel %vm70, %v1954, %v1941
    %v1960 = vcombine.low %v1946, %v1949
    %v1961 = vcombine.low %v1952, %v1955
    %v1963 = vunpack.c.l.s4 1966171168
    %v1964 = vunpack.c.0.s8 %v1963
    %v1965 = vlaneseq
    %v1966 = vshrl.u32 %v1965, 7
    %v1967 = vsub.s32 %v1964, %v1966
    %v1968 = vrot.slane %v1960, %v1967
    %v1970 = vunpack.c.l.s4 1966171168
    %v1971 = vunpack.c.0.s8 %v1970
    %v1972 = vlaneseq
    %v1973 = vshrl.u32 %v1972, 7
    %v1974 = vsub.s32 %v1971, %v1973
    %v1975 = vrot.slane %v1961, %v1974
    %v1976 = vcombine.low %v1968, %v1975
    %v1978 = vunpack.c.l.s4 1966171168
    %v1979 = vunpack.c.0.s8 %v1978
    %v1980 = vlaneseq
    %v1981 = vshrl.u32 %v1980, 7
    %v1982 = vsub.s32 %v1979, %v1981
    %v1983 = vrot.slane %v1976, %v1982
    %v1985 = vlaneseq
    %vm1986 = vcmp.ge.s32.totalorder %v1985, 0
    %vm1987 = vcmp.lt.s32.totalorder %v1985, 512
    %vm1988 = vmand %vm1986, %vm1987
    %1989 = vst.msk [vmem:[#allocation5] sm:$0xf] %vm1988, %v1983
    // Predicated region
    $region54: #{tpu_custom_call.1} parent=1 // pred_check
      _
    $region55: #{tpu_custom_call.1} parent=1 // pred_check_branch
      %1991 = sbr.rel (0) target = $region57
    $region56: #{tpu_custom_call.1} parent=1 // pred_region
      %s1993 = ssub.s32 64, 64
      %1994 = vsyncadd [#allocation4], %s1993
      %s1996 = sshll.u32 [#allocation5], 4
      %s1997 = int_to_ptr.vmem [resolvable:$true] %s1996
      %1999 = dma.vmem_to_hbm [thread:$0]  %s1997, 64, %s12, [#allocation4]
    $region57: #{tpu_custom_call.1} parent=1 // pred_fallthru
      _
    // Predicated region
    $region58: #{tpu_custom_call.1} parent=1 // pred_check
      _
    $region59: #{tpu_custom_call.1} parent=1 // pred_check_branch
      %2001 = sbr.rel (0) target = $region61
    $region60: #{tpu_custom_call.1} parent=1 // pred_region
      %2002 = dma.done [#allocation4], 64
    $region61: #{tpu_custom_call.1} parent=1 // pred_fallthru
      _
    %2003 = vsyncpa [#allocation3], 1
    %2004 = vsyncpa [#allocation4], 1

</llo_original>
